<compile_context>
chip_gen: v7x
topology: tpu7x:2x2x1
jax: 0.10.0
libtpu: 0.0.40
codegen_flags: <defaults>
</compile_context>

<pallas_src>
import functools

import jax
import jax.numpy as jnp
from jax.experimental import pallas as pl
from jax.experimental.pallas import tpu as pltpu

EPS = 1e-5
LANE = 128          # TPU lane width: channel dims are padded to a multiple of this


# ----------------------------- small helpers -------------------------------- #

def _round_up(x, m):
    return (x + m - 1) // m * m


def _pad_to(a, axis, size):
    pad = size - a.shape[axis]
    if pad <= 0:
        return a
    widths = [(0, 0)] * a.ndim
    widths[axis] = (0, pad)
    return jnp.pad(a, widths)


def _stride_parity(x, s):
    """(N,H,W,C) -> (s*s, N, Hq, Wq, C): SAME-1 pad then split rows/cols by
    residue mod s.  Plane q = pi*s + pj holds padded pixel (i*s+pi, j*s+pj) at
    (i, j).  Total bytes == input bytes (no 9x im2col duplication in HBM)."""
    n, h, w, c = x.shape
    xp = jnp.pad(x, ((0, 0), (1, 1), (1, 1), (0, 0)))
    hp, wp = h + 2, w + 2
    hq, wq = _round_up(hp, s), _round_up(wp, s)
    xp = jnp.pad(xp, ((0, 0), (0, hq - hp), (0, wq - wp), (0, 0)))
    xq = xp.reshape(n, hq // s, s, wq // s, s, c)
    xq = jnp.transpose(xq, (2, 4, 0, 1, 3, 5))
    return xq.reshape(s * s, n, hq // s, wq // s, c)


def _compiler_params(semantics):
    """Generation-aware scoped-VMEM limit: ~75% of physical VMEM, capped at
    100 MiB (v5e/v6e: 128 MiB physical -> ~96 MiB; v7x: 64 MiB -> 48 MiB)."""
    cap = None
    try:
        cap = getattr(pltpu.get_tpu_info(), "vmem_capacity_bytes", None)
    except Exception:
        cap = None
    if not cap:
        cap = 64 * 1024 * 1024          # conservative fallback (v7x physical)
    limit = min(int(cap) * 3 // 4, 100 * 1024 * 1024)
    return pltpu.CompilerParams(dimension_semantics=semantics,
                                vmem_limit_bytes=int(limit))


def _full(shape):
    """Single full-array block, constant across the (1-D) grid."""
    return pl.BlockSpec(shape, lambda i: (0,) * len(shape))


def _row_tile(rows, c):
    """Per-grid-step (1, rows, c) tile over the leading batch axis."""
    return pl.BlockSpec((1, rows, c), lambda i: (i, 0, 0))


# --------------------------- in-kernel helpers ------------------------------ #

def _bn_apply(x, stats, gamma, beta, count):
    """Apply BatchNorm given global (sum, sumsq) stats.  x: (rows, C) f32."""
    inv = 1.0 / count
    mean = stats[0:1, :] * inv
    var = stats[1:2, :] * inv - mean * mean     # biased var (PyTorch train BN)
    return (x - mean) * (jax.lax.rsqrt(var + EPS) * gamma) + beta


def _accum_stats(stats_ref, acc, is_first):
    """Accumulate per-tile (sum, sumsq) into a grid-resident (2, C) output."""
    part = jnp.concatenate([jnp.sum(acc, axis=0, keepdims=True),
                            jnp.sum(acc * acc, axis=0, keepdims=True)], axis=0)

    @pl.when(is_first)
    def _():
        stats_ref[...] = jnp.zeros_like(stats_ref)

    stats_ref[...] += part


def _conv3x3_merged(xq_ref, w_ref, patch_ref, *, s, ho, wo, cin):
    """One K = 9*cin MXU matmul for a 3x3 / stride-s conv.

    xq_ref : (s*s, 1, hq, wq, cin) bf16 stride-parity planes of one image
    w_ref  : (9*cin, cout)        bf16
    patch_ref : (ho*wo, 9*cin)    bf16 VMEM scratch (tap slices side-by-side)
    """
    t = 0
    for di in range(3):
        for dj in range(3):
            q = (di % s) * s + (dj % s)
            a, b = di // s, dj // s
            piece = xq_ref[q, 0, a:a + ho, b:b + wo, :].reshape(ho * wo, cin)
            patch_ref[:, t * cin:(t + 1) * cin] = piece
            t += 1
    return jnp.dot(patch_ref[...], w_ref[...], preferred_element_type=jnp.float32)


# ------------------------------- kernels ------------------------------------ #

def _conv1_kernel(xq_ref, w_ref, acc_ref, stats_ref, patch_ref,
                  *, s, ho, wo, cin):
    acc = _conv3x3_merged(xq_ref, w_ref, patch_ref, s=s, ho=ho, wo=wo, cin=cin)
    acc_ref[0] = acc.astype(acc_ref.dtype)
    _accum_stats(stats_ref, acc, pl.program_id(0) == 0)


def _conv1_proj_kernel(xq_ref, w_ref, xs_ref, ws_ref,
                       acc_ref, stats_ref, sacc_ref, sstats_ref, patch_ref,
                       *, s, ho, wo, cin):
    first = pl.program_id(0) == 0
    acc = _conv3x3_merged(xq_ref, w_ref, patch_ref, s=s, ho=ho, wo=wo, cin=cin)
    acc_ref[0] = acc.astype(acc_ref.dtype)
    _accum_stats(stats_ref, acc, first)
    # fused 1x1 projection shortcut (its BN stats accumulated the same way)
    sacc = jnp.dot(xs_ref[0], ws_ref[...], preferred_element_type=jnp.float32)
    sacc_ref[0] = sacc.astype(sacc_ref.dtype)
    _accum_stats(sstats_ref, sacc, first)


def _bn1_conv2_kernel(acc1_ref, stats1_ref, g1_ref, b1_ref, w2_ref,
                      acc2_ref, stats2_ref, pad_ref, patch_ref,
                      *, ho, wo, cp, count):
    i = pl.program_id(0)
    # finalize BN1 + ReLU (global stats were produced by the conv1 pass)
    y = _bn_apply(acc1_ref[0].astype(jnp.float32), stats1_ref[...],
                  g1_ref[...], b1_ref[...], count)
    y = jnp.maximum(y, 0.0)

    # SAME-pad in VMEM: zero the scratch once (border stays zero across steps),
    # rewrite the interior each step.  No HBM pad round-trip between convs.
    @pl.when(i == 0)
    def _():
        pad_ref[...] = jnp.zeros_like(pad_ref)

    pad_ref[1:1 + ho, 1:1 + wo, :] = y.reshape(ho, wo, cp).astype(pad_ref.dtype)

    # merged K = 9*cp matmul for conv2 (fills the 256-deep MXU contraction)
    t = 0
    for di in range(3):
        for dj in range(3):
            patch_ref[:, t * cp:(t + 1) * cp] = \
                pad_ref[di:di + ho, dj:dj + wo, :].reshape(ho * wo, cp)
            t += 1
    acc2 = jnp.dot(patch_ref[...], w2_ref[...], preferred_element_type=jnp.float32)
    acc2_ref[0] = acc2.astype(acc2_ref.dtype)
    _accum_stats(stats2_ref, acc2, i == 0)


def _finalize_proj_kernel(acc2_ref, stats2_ref, g2_ref, b2_ref,
                          sacc_ref, sstats_ref, gs_ref, bs_ref, out_ref,
                          *, count):
    y = _bn_apply(acc2_ref[0].astype(jnp.float32), stats2_ref[...],
                  g2_ref[...], b2_ref[...], count)
    sc = _bn_apply(sacc_ref[0].astype(jnp.float32), sstats_ref[...],
                   gs_ref[...], bs_ref[...], count)
    out_ref[0] = jnp.maximum(y + sc, 0.0).astype(out_ref.dtype)


def _finalize_id_kernel(acc2_ref, stats2_ref, g2_ref, b2_ref, res_ref, out_ref,
                        *, count):
    y = _bn_apply(acc2_ref[0].astype(jnp.float32), stats2_ref[...],
                  g2_ref[...], b2_ref[...], count)
    out_ref[0] = jnp.maximum(y + res_ref[0].astype(jnp.float32),
                             0.0).astype(out_ref.dtype)


# --------------------------- pallas_call wrappers ---------------------------- #

def conv1_pass(xq, w1r, xs=None, ws=None, *, s, n, ho, wo, cp):
    """conv1 (+ optional 1x1 projection shortcut) + partial BN stats, tiled over N."""
    rows = ho * wo
    cin = xq.shape[-1]
    xq_spec = pl.BlockSpec((s * s, 1) + tuple(xq.shape[2:]),
                           lambda i: (0, i, 0, 0, 0))
    tile_bf = _row_tile(rows, cp)
    acc_shape = jax.ShapeDtypeStruct((n, rows, cp), jnp.bfloat16)
    stats_shape = jax.ShapeDtypeStruct((2, cp), jnp.float32)
    scratch = [pltpu.VMEM((rows, 9 * cin), jnp.bfloat16)]
    # "arbitrary": the stats accumulator output is carried across grid steps.
    params = _compiler_params(("arbitrary",))

    if xs is None:
        kern = functools.partial(_conv1_kernel, s=s, ho=ho, wo=wo, cin=cin)
        return pl.pallas_call(
            kern, grid=(n,),
            in_specs=(xq_spec, _full(w1r.shape)),
            out_specs=(tile_bf, _full((2, cp))),
            out_shape=(acc_shape, stats_shape),
            scratch_shapes=scratch, compiler_params=params,
        )(xq, w1r)

    kern = functools.partial(_conv1_proj_kernel, s=s, ho=ho, wo=wo, cin=cin)
    return pl.pallas_call(
        kern, grid=(n,),
        in_specs=(xq_spec, _full(w1r.shape),
                  _row_tile(rows, xs.shape[-1]), _full(ws.shape)),
        out_specs=(tile_bf, _full((2, cp)), _row_tile(rows, cp), _full((2, cp))),
        out_shape=(acc_shape, stats_shape,
                   jax.ShapeDtypeStruct((n, rows, cp), jnp.float32),  # shortcut acc
                   stats_shape),
        scratch_shapes=scratch, compiler_params=params,
    )(xq, w1r, xs, ws)


def conv2_pass(acc1, stats1, g1, b1, w2r, *, n, ho, wo, cp, count):
    """BN1 finalize + ReLU + conv2 (+ partial BN2 stats), tiled over N."""
    rows = ho * wo
    tile = _row_tile(rows, cp)
    kern = functools.partial(_bn1_conv2_kernel, ho=ho, wo=wo, cp=cp, count=count)
    return pl.pallas_call(
        kern, grid=(n,),
        in_specs=(tile, _full(stats1.shape), _full(g1.shape), _full(b1.shape),
                  _full(w2r.shape)),
        out_specs=(tile, _full((2, cp))),
        out_shape=(jax.ShapeDtypeStruct((n, rows, cp), jnp.float32),
                   jax.ShapeDtypeStruct((2, cp), jnp.float32)),
        scratch_shapes=[pltpu.VMEM((ho + 2, wo + 2, cp), jnp.bfloat16),
                        pltpu.VMEM((rows, 9 * cp), jnp.bfloat16)],
        compiler_params=_compiler_params(("arbitrary",)),
    )(acc1, stats1, g1, b1, w2r)


def finalize_proj(acc2, stats2, g2, b2, sacc, sstats, gs, bs,
                  *, n, rows, cp, count, out_dtype=jnp.float32):
    tile = _row_tile(rows, cp)
    kern = functools.partial(_finalize_proj_kernel, count=count)
    return pl.pallas_call(
        kern, grid=(n,),
        in_specs=(tile, _full(stats2.shape), _full(g2.shape), _full(b2.shape),
                  tile, _full(sstats.shape), _full(gs.shape), _full(bs.shape)),
        out_specs=tile,
        out_shape=jax.ShapeDtypeStruct((n, rows, cp), out_dtype),
        compiler_params=_compiler_params(("parallel",)),   # v7x: both TensorCores
    )(acc2, stats2, g2, b2, sacc, sstats, gs, bs)


def finalize_identity(acc2, stats2, g2, b2, res,
                      *, n, rows, cp, count, out_dtype=jnp.float32):
    tile = _row_tile(rows, cp)
    kern = functools.partial(_finalize_id_kernel, count=count)
    return pl.pallas_call(
        kern, grid=(n,),
        in_specs=(tile, _full(stats2.shape), _full(g2.shape), _full(b2.shape),
                  tile),
        out_specs=tile,
        out_shape=jax.ShapeDtypeStruct((n, rows, cp), out_dtype),
        compiler_params=_compiler_params(("parallel",)),
    )(acc2, stats2, g2, b2, res)


# ------------------------------- JAX glue ------------------------------------ #

def basic_block_forward(x_nhwc, params, stride, out_dtype=jnp.float32):
    """Forward pass of the ResNet basic_block.  x_nhwc: (N, H, W, Cin) f32."""
    n, h, w_sp, cin = x_nhwc.shape
    p = params["w1"].shape[-1]                 # planes
    cp = _round_up(p, LANE)                    # lane-dense channel width
    ho = (h + 2 - 3) // stride + 1
    wo = (w_sp + 2 - 3) // stride + 1
    rows = ho * wo
    m = n * rows                               # BN batch-stat count

    x_bf = x_nhwc.astype(jnp.bfloat16)         # bf16 MXU operands, f32 accumulation

    # weights reshaped to the merged-K layouts (HWIO -> (9*Cin, Cp)), bf16
    w1r = _pad_to(params["w1"], 3, cp).reshape(9 * cin, cp).astype(jnp.bfloat16)
    w2r = _pad_to(_pad_to(params["w2"], 2, cp), 3, cp) \
        .reshape(9 * cp, cp).astype(jnp.bfloat16)
    g1 = _pad_to(params["g1"], 1, cp)
    b1 = _pad_to(params["b1"], 1, cp)
    g2 = _pad_to(params["g2"], 1, cp)
    b2 = _pad_to(params["b2"], 1, cp)

    xq1 = _stride_parity(x_bf, stride)

    if "ws" in params:
        xs = x_bf[:, ::stride, ::stride, :].reshape(n, rows, cin)
        ws = _pad_to(params["ws"].reshape(cin, p), 1, cp).astype(jnp.bfloat16)
        acc1, stats1, sacc, sstats = conv1_pass(
            xq1, w1r, xs, ws, s=stride, n=n, ho=ho, wo=wo, cp=cp)
    else:
        assert stride == 1 and cin == p, \
            "identity shortcut requires stride == 1 and in_planes == planes"
        acc1, stats1 = conv1_pass(xq1, w1r, s=stride, n=n, ho=ho, wo=wo, cp=cp)

    acc2, stats2 = conv2_pass(acc1, stats1, g1, b1, w2r,
                              n=n, ho=ho, wo=wo, cp=cp, count=m)

    if "ws" in params:
        gs = _pad_to(params["gs"], 1, cp)
        bs = _pad_to(params["bs"], 1, cp)
        out = finalize_proj(acc2, stats2, g2, b2, sacc, sstats, gs, bs,
                            n=n, rows=rows, cp=cp, count=m, out_dtype=out_dtype)
    else:
        res = _pad_to(x_nhwc, 3, cp).reshape(n, rows, cp)
        out = finalize_identity(acc2, stats2, g2, b2, res,
                                n=n, rows=rows, cp=cp, count=m,
                                out_dtype=out_dtype)

    # Block boundary: unpad channels.  In a multi-block network keep the padded
    # lane-dense (cp) bf16 layout between blocks instead of slicing here.
    return out.reshape(n, ho, wo, cp)[..., :p]


# --------------------------- pure-JAX reference ------------------------------ #

def _ref_bn(x, gamma, beta):
    mean = x.mean(axis=(0, 1, 2), keepdims=True)
    var = ((x - mean) ** 2).mean(axis=(0, 1, 2), keepdims=True)
    return (x - mean) * jax.lax.rsqrt(var + EPS) * gamma.reshape(1, 1, 1, -1) \
        + beta.reshape(1, 1, 1, -1)


def _ref_conv(x, w, stride, pad):
    return jax.lax.conv_general_dilated(
        x, w, window_strides=(stride, stride), padding=[(pad, pad), (pad, pad)],
        dimension_numbers=("NHWC", "HWIO", "NHWC"),
        precision=jax.lax.Precision.HIGHEST)


def basic_block_reference(x_nhwc, params, stride):
    out = jax.nn.relu(_ref_bn(_ref_conv(x_nhwc, params["w1"], stride, 1),
                              params["g1"], params["b1"]))
    out = _ref_bn(_ref_conv(out, params["w2"], 1, 1), params["g2"], params["b2"])
    if "ws" in params:
        sc = _ref_bn(_ref_conv(x_nhwc, params["ws"], stride, 0),
                     params["gs"], params["bs"])
    else:
        sc = x_nhwc
    return jax.nn.relu(out + sc)


# ---------------------------------- main ------------------------------------- #

def _bn_params(k, c):
    kg, kb = jax.random.split(k)
    gamma = (1.0 + 0.1 * jax.random.normal(kg, (1, c))).astype(jnp.float32)
    beta = (0.1 * jax.random.normal(kb, (1, c))).astype(jnp.float32)
    return gamma, beta


def _make_params(key, cin, planes, with_proj):
    k1, k2, k3, kb = jax.random.split(key, 4)
    kb1, kb2, kbs = jax.random.split(kb, 3)
    g1, b1 = _bn_params(kb1, planes)
    g2, b2 = _bn_params(kb2, planes)
    params = {
        # conv weights stored HWIO (kh, kw, Cin, Cout)
        "w1": 0.1 * jax.random.normal(k1, (3, 3, cin, planes), jnp.float32),
        "g1": g1, "b1": b1,
        "w2": 0.1 * jax.random.normal(k2, (3, 3, planes, planes), jnp.float32),
        "g2": g2, "b2": b2,
    }
    if with_proj:
        gs, bs = _bn_params(kbs, planes)
        params.update({
            "ws": 0.1 * jax.random.normal(k3, (1, 1, cin, planes), jnp.float32),
            "gs": gs, "bs": bs,
        })
    return params


if __name__ == "__main__":
    root = jax.random.PRNGKey(0)
    k_a, k_b = jax.random.split(root)

    # --- config 1: projection-shortcut path (stride != 1, Cin != planes) ---
    N, Cin, H, W = 2, 4, 16, 16
    planes, stride = 8, 2
    kx, kp = jax.random.split(k_a)
    x_nchw = jax.random.normal(kx, (N, Cin, H, W), jnp.float32)   # PyTorch layout
    x_nhwc = jnp.transpose(x_nchw, (0, 2, 3, 1))
    params = _make_params(kp, Cin, planes, with_proj=True)

    out = jax.block_until_ready(basic_block_forward(x_nhwc, params, stride))
    ref = jax.block_until_ready(basic_block_reference(x_nhwc, params, stride))
    assert out.shape == (N, H // stride, W // stride, planes)
    assert jnp.allclose(out, ref, atol=3e-2, rtol=3e-2), \
        float(jnp.abs(out - ref).max())

    # --- config 2: identity-shortcut path (stride == 1, Cin == planes) ---
    N2, C2, H2, W2 = 2, 8, 8, 8
    kx2, kp2 = jax.random.split(k_b)
    x2_nchw = jax.random.normal(kx2, (N2, C2, H2, W2), jnp.float32)
    x2_nhwc = jnp.transpose(x2_nchw, (0, 2, 3, 1))
    params2 = _make_params(kp2, C2, C2, with_proj=False)

    out2 = jax.block_until_ready(basic_block_forward(x2_nhwc, params2, 1))
    ref2 = jax.block_until_ready(basic_block_reference(x2_nhwc, params2, 1))
    assert out2.shape == (N2, H2, W2, C2)
    assert jnp.allclose(out2, ref2, atol=3e-2, rtol=3e-2), \
        float(jnp.abs(out2 - ref2).max())

    print("KERNEL_OK")
</pallas_src>

<mosaic_0001>
module attributes {stable_mosaic.version = 11 : i64} {
  func.func @_conv1_proj_kernel(%arg0: i32, %arg1: memref<4x1x9x9x4xbf16, #tpu.memory_space<vmem>>, %arg2: memref<36x128xbf16, #tpu.memory_space<vmem>>, %arg3: memref<1x64x4xbf16, #tpu.memory_space<vmem>>, %arg4: memref<4x128xbf16, #tpu.memory_space<vmem>>, %arg5: memref<1x64x128xbf16, #tpu.memory_space<vmem>>, %arg6: memref<2x128xf32, #tpu.memory_space<vmem>>, %arg7: memref<1x64x128xf32, #tpu.memory_space<vmem>>, %arg8: memref<2x128xf32, #tpu.memory_space<vmem>>, %arg9: memref<64x36xbf16, #tpu.memory_space<vmem>>) attributes {dimension_semantics = [#tpu.dimension_semantics<arbitrary>], iteration_bounds = array<i64: 2>, scalar_prefetch = 0 : i64, scratch_operands = 1 : i64, tpu.core_type = #tpu.core_type<tc>, window_params = [{transform_indices = @transform_0, window_bounds = array<i64: 4, 1, 9, 9, 4>}, {pipeline_mode = #tpu.pipeline_mode<synchronous>, transform_indices = @transform_1, window_bounds = array<i64: 36, 128>}, {transform_indices = @transform_2, window_bounds = array<i64: 1, 64, 4>}, {pipeline_mode = #tpu.pipeline_mode<synchronous>, transform_indices = @transform_3, window_bounds = array<i64: 4, 128>}, {transform_indices = @transform_4, window_bounds = array<i64: 1, 64, 128>}, {pipeline_mode = #tpu.pipeline_mode<synchronous>, transform_indices = @transform_5, window_bounds = array<i64: 2, 128>}, {transform_indices = @transform_6, window_bounds = array<i64: 1, 64, 128>}, {pipeline_mode = #tpu.pipeline_mode<synchronous>, transform_indices = @transform_7, window_bounds = array<i64: 2, 128>}]} {
    %c0_i32 = arith.constant 0 : i32
    %0 = arith.cmpi eq, %arg0, %c0_i32 : i32
    %c0 = arith.constant 0 : index
    %c0_0 = arith.constant 0 : index
    %c0_1 = arith.constant 0 : index
    %c0_2 = arith.constant 0 : index
    %c0_3 = arith.constant 0 : index
    %1 = vector.load %arg1[%c0, %c0_0, %c0_1, %c0_2, %c0_3] : memref<4x1x9x9x4xbf16, #tpu.memory_space<vmem>>, vector<1x1x8x8x4xbf16>
    %2 = vector.shape_cast %1 : vector<1x1x8x8x4xbf16> to vector<8x8x4xbf16>
    %3 = vector.shape_cast %2 : vector<8x8x4xbf16> to vector<64x4xbf16>
    %c0_4 = arith.constant 0 : index
    %c0_5 = arith.constant 0 : index
    %4 = vector.load %arg9[%c0_4, %c0_5] : memref<64x36xbf16, #tpu.memory_space<vmem>>, vector<64x4xbf16>
    tpu.vector_store %arg9[%c0_4, %c0_5], %3 {strides = array<i32>} : memref<64x36xbf16, #tpu.memory_space<vmem>>, vector<64x4xbf16>,
    %c1 = arith.constant 1 : index
    %c0_6 = arith.constant 0 : index
    %c0_7 = arith.constant 0 : index
    %c0_8 = arith.constant 0 : index
    %c0_9 = arith.constant 0 : index
    %5 = vector.load %arg1[%c1, %c0_6, %c0_7, %c0_8, %c0_9] : memref<4x1x9x9x4xbf16, #tpu.memory_space<vmem>>, vector<1x1x8x8x4xbf16>
    %6 = vector.shape_cast %5 : vector<1x1x8x8x4xbf16> to vector<8x8x4xbf16>
    %7 = vector.shape_cast %6 : vector<8x8x4xbf16> to vector<64x4xbf16>
    %c0_10 = arith.constant 0 : index
    %c4 = arith.constant 4 : index
    %8 = vector.load %arg9[%c0_10, %c4] : memref<64x36xbf16, #tpu.memory_space<vmem>>, vector<64x4xbf16>
    tpu.vector_store %arg9[%c0_10, %c4], %7 {strides = array<i32>} : memref<64x36xbf16, #tpu.memory_space<vmem>>, vector<64x4xbf16>,
    %c0_11 = arith.constant 0 : index
    %c0_12 = arith.constant 0 : index
    %c0_13 = arith.constant 0 : index
    %c1_14 = arith.constant 1 : index
    %c0_15 = arith.constant 0 : index
    %9 = vector.load %arg1[%c0_11, %c0_12, %c0_13, %c1_14, %c0_15] : memref<4x1x9x9x4xbf16, #tpu.memory_space<vmem>>, vector<1x1x8x8x4xbf16>
    %10 = vector.shape_cast %9 : vector<1x1x8x8x4xbf16> to vector<8x8x4xbf16>
    %11 = vector.shape_cast %10 : vector<8x8x4xbf16> to vector<64x4xbf16>
    %c0_16 = arith.constant 0 : index
    %c8 = arith.constant 8 : index
    %12 = vector.load %arg9[%c0_16, %c8] : memref<64x36xbf16, #tpu.memory_space<vmem>>, vector<64x4xbf16>
    tpu.vector_store %arg9[%c0_16, %c8], %11 {strides = array<i32>} : memref<64x36xbf16, #tpu.memory_space<vmem>>, vector<64x4xbf16>,
    %c2 = arith.constant 2 : index
    %c0_17 = arith.constant 0 : index
    %c0_18 = arith.constant 0 : index
    %c0_19 = arith.constant 0 : index
    %c0_20 = arith.constant 0 : index
    %13 = vector.load %arg1[%c2, %c0_17, %c0_18, %c0_19, %c0_20] : memref<4x1x9x9x4xbf16, #tpu.memory_space<vmem>>, vector<1x1x8x8x4xbf16>
    %14 = vector.shape_cast %13 : vector<1x1x8x8x4xbf16> to vector<8x8x4xbf16>
    %15 = vector.shape_cast %14 : vector<8x8x4xbf16> to vector<64x4xbf16>
    %c0_21 = arith.constant 0 : index
    %c12 = arith.constant 12 : index
    %16 = vector.load %arg9[%c0_21, %c12] : memref<64x36xbf16, #tpu.memory_space<vmem>>, vector<64x4xbf16>
    tpu.vector_store %arg9[%c0_21, %c12], %15 {strides = array<i32>} : memref<64x36xbf16, #tpu.memory_space<vmem>>, vector<64x4xbf16>,
    %c3 = arith.constant 3 : index
    %c0_22 = arith.constant 0 : index
    %c0_23 = arith.constant 0 : index
    %c0_24 = arith.constant 0 : index
    %c0_25 = arith.constant 0 : index
    %17 = vector.load %arg1[%c3, %c0_22, %c0_23, %c0_24, %c0_25] : memref<4x1x9x9x4xbf16, #tpu.memory_space<vmem>>, vector<1x1x8x8x4xbf16>
    %18 = vector.shape_cast %17 : vector<1x1x8x8x4xbf16> to vector<8x8x4xbf16>
    %19 = vector.shape_cast %18 : vector<8x8x4xbf16> to vector<64x4xbf16>
    %c0_26 = arith.constant 0 : index
    %c16 = arith.constant 16 : index
    %20 = vector.load %arg9[%c0_26, %c16] : memref<64x36xbf16, #tpu.memory_space<vmem>>, vector<64x4xbf16>
    tpu.vector_store %arg9[%c0_26, %c16], %19 {strides = array<i32>} : memref<64x36xbf16, #tpu.memory_space<vmem>>, vector<64x4xbf16>,
    %c2_27 = arith.constant 2 : index
    %c0_28 = arith.constant 0 : index
    %c0_29 = arith.constant 0 : index
    %c1_30 = arith.constant 1 : index
    %c0_31 = arith.constant 0 : index
    %21 = vector.load %arg1[%c2_27, %c0_28, %c0_29, %c1_30, %c0_31] : memref<4x1x9x9x4xbf16, #tpu.memory_space<vmem>>, vector<1x1x8x8x4xbf16>
    %22 = vector.shape_cast %21 : vector<1x1x8x8x4xbf16> to vector<8x8x4xbf16>
    %23 = vector.shape_cast %22 : vector<8x8x4xbf16> to vector<64x4xbf16>
    %c0_32 = arith.constant 0 : index
    %c20 = arith.constant 20 : index
    %24 = vector.load %arg9[%c0_32, %c20] : memref<64x36xbf16, #tpu.memory_space<vmem>>, vector<64x4xbf16>
    tpu.vector_store %arg9[%c0_32, %c20], %23 {strides = array<i32>} : memref<64x36xbf16, #tpu.memory_space<vmem>>, vector<64x4xbf16>,
    %c0_33 = arith.constant 0 : index
    %c0_34 = arith.constant 0 : index
    %c1_35 = arith.constant 1 : index
    %c0_36 = arith.constant 0 : index
    %c0_37 = arith.constant 0 : index
    %25 = vector.load %arg1[%c0_33, %c0_34, %c1_35, %c0_36, %c0_37] : memref<4x1x9x9x4xbf16, #tpu.memory_space<vmem>>, vector<1x1x8x8x4xbf16>
    %26 = vector.shape_cast %25 : vector<1x1x8x8x4xbf16> to vector<8x8x4xbf16>
    %27 = vector.shape_cast %26 : vector<8x8x4xbf16> to vector<64x4xbf16>
    %c0_38 = arith.constant 0 : index
    %c24 = arith.constant 24 : index
    %28 = vector.load %arg9[%c0_38, %c24] : memref<64x36xbf16, #tpu.memory_space<vmem>>, vector<64x4xbf16>
    tpu.vector_store %arg9[%c0_38, %c24], %27 {strides = array<i32>} : memref<64x36xbf16, #tpu.memory_space<vmem>>, vector<64x4xbf16>,
    %c1_39 = arith.constant 1 : index
    %c0_40 = arith.constant 0 : index
    %c1_41 = arith.constant 1 : index
    %c0_42 = arith.constant 0 : index
    %c0_43 = arith.constant 0 : index
    %29 = vector.load %arg1[%c1_39, %c0_40, %c1_41, %c0_42, %c0_43] : memref<4x1x9x9x4xbf16, #tpu.memory_space<vmem>>, vector<1x1x8x8x4xbf16>
    %30 = vector.shape_cast %29 : vector<1x1x8x8x4xbf16> to vector<8x8x4xbf16>
    %31 = vector.shape_cast %30 : vector<8x8x4xbf16> to vector<64x4xbf16>
    %c0_44 = arith.constant 0 : index
    %c28 = arith.constant 28 : index
    %32 = vector.load %arg9[%c0_44, %c28] : memref<64x36xbf16, #tpu.memory_space<vmem>>, vector<64x4xbf16>
    tpu.vector_store %arg9[%c0_44, %c28], %31 {strides = array<i32>} : memref<64x36xbf16, #tpu.memory_space<vmem>>, vector<64x4xbf16>,
    %c0_45 = arith.constant 0 : index
    %c0_46 = arith.constant 0 : index
    %c1_47 = arith.constant 1 : index
    %c1_48 = arith.constant 1 : index
    %c0_49 = arith.constant 0 : index
    %33 = vector.load %arg1[%c0_45, %c0_46, %c1_47, %c1_48, %c0_49] : memref<4x1x9x9x4xbf16, #tpu.memory_space<vmem>>, vector<1x1x8x8x4xbf16>
    %34 = vector.shape_cast %33 : vector<1x1x8x8x4xbf16> to vector<8x8x4xbf16>
    %35 = vector.shape_cast %34 : vector<8x8x4xbf16> to vector<64x4xbf16>
    %c0_50 = arith.constant 0 : index
    %c32 = arith.constant 32 : index
    %36 = vector.load %arg9[%c0_50, %c32] : memref<64x36xbf16, #tpu.memory_space<vmem>>, vector<64x4xbf16>
    tpu.vector_store %arg9[%c0_50, %c32], %35 {strides = array<i32>} : memref<64x36xbf16, #tpu.memory_space<vmem>>, vector<64x4xbf16>,
    %c0_51 = arith.constant 0 : index
    %c0_52 = arith.constant 0 : index
    %37 = vector.load %arg9[%c0_51, %c0_52] : memref<64x36xbf16, #tpu.memory_space<vmem>>, vector<64x36xbf16>
    %c0_53 = arith.constant 0 : index
    %c0_54 = arith.constant 0 : index
    %38 = vector.load %arg2[%c0_53, %c0_54] : memref<36x128xbf16, #tpu.memory_space<vmem>>, vector<36x128xbf16>
    %cst = arith.constant dense<0.000000e+00> : vector<64x128xf32>
    %39 = tpu.matmul %37, %38, %cst {dimension_numbers = #tpu.dot_dimension_numbers<[1], [0], [0], [1], [0, 0, 1, 1], [], []>} : vector<64x36xbf16>, vector<36x128xbf16>, vector<64x128xf32> -> vector<64x128xf32>
    %40 = arith.truncf %39 : vector<64x128xf32> to vector<64x128xbf16>
    %c0_55 = arith.constant 0 : index
    %c0_56 = arith.constant 0 : index
    %c0_57 = arith.constant 0 : index
    %41 = vector.load %arg5[%c0_55, %c0_56, %c0_57] : memref<1x64x128xbf16, #tpu.memory_space<vmem>>, vector<1x64x128xbf16>
    %42 = vector.shape_cast %41 : vector<1x64x128xbf16> to vector<64x128xbf16>
    %43 = vector.shape_cast %40 : vector<64x128xbf16> to vector<1x64x128xbf16>
    tpu.vector_store %arg5[%c0_55, %c0_56, %c0_57], %43 {strides = array<i32>} : memref<1x64x128xbf16, #tpu.memory_space<vmem>>, vector<1x64x128xbf16>,
    %cst_58 = arith.constant dense<0.000000e+00> : vector<128xf32>
    %44 = vector.multi_reduction <add>, %39, %cst_58 [0] : vector<64x128xf32> to vector<128xf32>
    %45 = vector.shape_cast %44 : vector<128xf32> to vector<1x128xf32>
    %46 = arith.mulf %39, %39 : vector<64x128xf32>
    %cst_59 = arith.constant dense<0.000000e+00> : vector<128xf32>
    %47 = vector.multi_reduction <add>, %46, %cst_59 [0] : vector<64x128xf32> to vector<128xf32>
    %48 = vector.shape_cast %47 : vector<128xf32> to vector<1x128xf32>
    %49 = tpu.concatenate %45, %48 in 0 : vector<1x128xf32>, vector<1x128xf32> -> vector<2x128xf32>
    %50 = arith.extui %0 : i1 to i32
    %c0_i32_60 = arith.constant 0 : i32
    %51 = arith.cmpi ne, %50, %c0_i32_60 : i32
    scf.if %51 {
      %cst_81 = arith.constant 0.000000e+00 : f32
      %73 = vector.broadcast %cst_81 : f32 to vector<2x128xf32>
      %c0_82 = arith.constant 0 : index
      %c0_83 = arith.constant 0 : index
      %74 = vector.load %arg6[%c0_82, %c0_83] : memref<2x128xf32, #tpu.memory_space<vmem>>, vector<2x128xf32>
      tpu.vector_store %arg6[%c0_82, %c0_83], %73 {strides = array<i32>} : memref<2x128xf32, #tpu.memory_space<vmem>>, vector<2x128xf32>,
    } else {
    }
    %c0_61 = arith.constant 0 : index
    %c0_62 = arith.constant 0 : index
    %52 = vector.load %arg6[%c0_61, %c0_62] : memref<2x128xf32, #tpu.memory_space<vmem>>, vector<2x128xf32>
    %53 = arith.addf %52, %49 : vector<2x128xf32>
    %c0_63 = arith.constant 0 : index
    %c0_64 = arith.constant 0 : index
    %54 = vector.load %arg6[%c0_63, %c0_64] : memref<2x128xf32, #tpu.memory_space<vmem>>, vector<2x128xf32>
    tpu.vector_store %arg6[%c0_63, %c0_64], %53 {strides = array<i32>} : memref<2x128xf32, #tpu.memory_space<vmem>>, vector<2x128xf32>,
    %c0_65 = arith.constant 0 : index
    %c0_66 = arith.constant 0 : index
    %c0_67 = arith.constant 0 : index
    %55 = vector.load %arg3[%c0_65, %c0_66, %c0_67] : memref<1x64x4xbf16, #tpu.memory_space<vmem>>, vector<1x64x4xbf16>
    %56 = vector.shape_cast %55 : vector<1x64x4xbf16> to vector<64x4xbf16>
    %c0_68 = arith.constant 0 : index
    %c0_69 = arith.constant 0 : index
    %57 = vector.load %arg4[%c0_68, %c0_69] : memref<4x128xbf16, #tpu.memory_space<vmem>>, vector<4x128xbf16>
    %cst_70 = arith.constant dense<0.000000e+00> : vector<64x128xf32>
    %58 = tpu.matmul %56, %57, %cst_70 {dimension_numbers = #tpu.dot_dimension_numbers<[1], [0], [0], [1], [0, 0, 1, 1], [], []>} : vector<64x4xbf16>, vector<4x128xbf16>, vector<64x128xf32> -> vector<64x128xf32>
    %c0_71 = arith.constant 0 : index
    %c0_72 = arith.constant 0 : index
    %c0_73 = arith.constant 0 : index
    %59 = vector.load %arg7[%c0_71, %c0_72, %c0_73] : memref<1x64x128xf32, #tpu.memory_space<vmem>>, vector<1x64x128xf32>
    %60 = vector.shape_cast %59 : vector<1x64x128xf32> to vector<64x128xf32>
    %61 = vector.shape_cast %58 : vector<64x128xf32> to vector<1x64x128xf32>
    tpu.vector_store %arg7[%c0_71, %c0_72, %c0_73], %61 {strides = array<i32>} : memref<1x64x128xf32, #tpu.memory_space<vmem>>, vector<1x64x128xf32>,
    %cst_74 = arith.constant dense<0.000000e+00> : vector<128xf32>
    %62 = vector.multi_reduction <add>, %58, %cst_74 [0] : vector<64x128xf32> to vector<128xf32>
    %63 = vector.shape_cast %62 : vector<128xf32> to vector<1x128xf32>
    %64 = arith.mulf %58, %58 : vector<64x128xf32>
    %cst_75 = arith.constant dense<0.000000e+00> : vector<128xf32>
    %65 = vector.multi_reduction <add>, %64, %cst_75 [0] : vector<64x128xf32> to vector<128xf32>
    %66 = vector.shape_cast %65 : vector<128xf32> to vector<1x128xf32>
    %67 = tpu.concatenate %63, %66 in 0 : vector<1x128xf32>, vector<1x128xf32> -> vector<2x128xf32>
    %68 = arith.extui %0 : i1 to i32
    %c0_i32_76 = arith.constant 0 : i32
    %69 = arith.cmpi ne, %68, %c0_i32_76 : i32
    scf.if %69 {
      %cst_81 = arith.constant 0.000000e+00 : f32
      %73 = vector.broadcast %cst_81 : f32 to vector<2x128xf32>
      %c0_82 = arith.constant 0 : index
      %c0_83 = arith.constant 0 : index
      %74 = vector.load %arg8[%c0_82, %c0_83] : memref<2x128xf32, #tpu.memory_space<vmem>>, vector<2x128xf32>
      tpu.vector_store %arg8[%c0_82, %c0_83], %73 {strides = array<i32>} : memref<2x128xf32, #tpu.memory_space<vmem>>, vector<2x128xf32>,
    } else {
    }
    %c0_77 = arith.constant 0 : index
    %c0_78 = arith.constant 0 : index
    %70 = vector.load %arg8[%c0_77, %c0_78] : memref<2x128xf32, #tpu.memory_space<vmem>>, vector<2x128xf32>
    %71 = arith.addf %70, %67 : vector<2x128xf32>
    %c0_79 = arith.constant 0 : index
    %c0_80 = arith.constant 0 : index
    %72 = vector.load %arg8[%c0_79, %c0_80] : memref<2x128xf32, #tpu.memory_space<vmem>>, vector<2x128xf32>
    tpu.vector_store %arg8[%c0_79, %c0_80], %71 {strides = array<i32>} : memref<2x128xf32, #tpu.memory_space<vmem>>, vector<2x128xf32>,
    return
  }
  func.func @transform_0(%arg0: i32) -> (i32, i32, i32, i32, i32) {
    %c0_i32 = arith.constant 0 : i32
    %c0_i32_0 = arith.constant 0 : i32
    %c0_i32_1 = arith.constant 0 : i32
    %c0_i32_2 = arith.constant 0 : i32
    %c0_i32_3 = arith.constant 0 : i32
    return %c0_i32, %arg0, %c0_i32_0, %c0_i32_1, %c0_i32_2 : i32, i32, i32, i32, i32
  }
  func.func @transform_1(%arg0: i32) -> (i32, i32) {
    %c0_i32 = arith.constant 0 : i32
    %c0_i32_0 = arith.constant 0 : i32
    %c0_i32_1 = arith.constant 0 : i32
    return %c0_i32, %c0_i32_0 : i32, i32
  }
  func.func @transform_2(%arg0: i32) -> (i32, i32, i32) {
    %c0_i32 = arith.constant 0 : i32
    %c0_i32_0 = arith.constant 0 : i32
    %c0_i32_1 = arith.constant 0 : i32
    return %arg0, %c0_i32, %c0_i32_0 : i32, i32, i32
  }
  func.func @transform_3(%arg0: i32) -> (i32, i32) {
    %c0_i32 = arith.constant 0 : i32
    %c0_i32_0 = arith.constant 0 : i32
    %c0_i32_1 = arith.constant 0 : i32
    return %c0_i32, %c0_i32_0 : i32, i32
  }
  func.func @transform_4(%arg0: i32) -> (i32, i32, i32) {
    %c0_i32 = arith.constant 0 : i32
    %c0_i32_0 = arith.constant 0 : i32
    %c0_i32_1 = arith.constant 0 : i32
    return %arg0, %c0_i32, %c0_i32_0 : i32, i32, i32
  }
  func.func @transform_5(%arg0: i32) -> (i32, i32) {
    %c0_i32 = arith.constant 0 : i32
    %c0_i32_0 = arith.constant 0 : i32
    %c0_i32_1 = arith.constant 0 : i32
    return %c0_i32, %c0_i32_0 : i32, i32
  }
  func.func @transform_6(%arg0: i32) -> (i32, i32, i32) {
    %c0_i32 = arith.constant 0 : i32
    %c0_i32_0 = arith.constant 0 : i32
    %c0_i32_1 = arith.constant 0 : i32
    return %arg0, %c0_i32, %c0_i32_0 : i32, i32, i32
  }
  func.func @transform_7(%arg0: i32) -> (i32, i32) {
    %c0_i32 = arith.constant 0 : i32
    %c0_i32_0 = arith.constant 0 : i32
    %c0_i32_1 = arith.constant 0 : i32
    return %c0_i32, %c0_i32_0 : i32, i32
  }
}

</mosaic_0001>

<llo_original>
// kernel: tpu_custom_call.1
$region0: #{tpu_custom_call.1}
  #allocation0 [shape = 'u32[]', space=smem, size = 0x4, offset = 0x4, fixed_abs, tag = 'smem constant byte address 0x4 - core index']
  #allocation1 [shape = 'u32[144,128]{1,0:T(1,128)}', space=vmem, size = 0x12000, scoped, tag = 'internal scratch']
  #allocation2 [shape = 'bf16[64,36]{1,0:T(16,128)(2,1)}', space=vmem, size = 0x4000, scoped, tag = 'scratch operand']
  %s0 = inlined_call_operand.vmem [shape: bf16[4,2,9,9,4], index: 0, kind: input, shape index: {}]
  %s1 = inlined_call_operand.vmem [shape: bf16[36,128], index: 1, kind: input, shape index: {}]
  %s2 = inlined_call_operand.vmem [shape: bf16[2,64,4], index: 2, kind: input, shape index: {}]
  %s3 = inlined_call_operand.vmem [shape: bf16[4,128], index: 3, kind: input, shape index: {}]
  %s4 = inlined_call_operand.hbm [shape: bf16[2,64,128], index: 4, kind: output, shape index: {0}]
  %s5 = inlined_call_operand.hbm [shape: f32[2,128], index: 5, kind: output, shape index: {1}]
  %s6 = inlined_call_operand.hbm [shape: f32[2,64,128], index: 6, kind: output, shape index: {2}]
  %s7 = inlined_call_operand.hbm [shape: f32[2,128], index: 7, kind: output, shape index: {3}]
  %8 = xla_tuple %s4, %s5, %s6, %s7
  %s9 = sld [smem:[#allocation0]]
  $region122: #{tpu_custom_call.1} parent=0
    _
  %s11 = ssub.s32 1, %s9
  %s12 = scalar_select 0, %s11, %s9
  $region1: #{tpu_custom_call.1} parent=0
    #allocation3 [shape = 'u8[294912]{0}', space=vmem, size = 0x48000, scoped, tag = 'input window, operand 0']
    #allocation4 [shape = 'u8[32768]{0}', space=vmem, size = 0x8000, scoped, tag = 'output window, operand 0']
    #allocation5 [shape = 's32[2]{0}', space=sflag, size = 0x8, scoped, tag = 'scoped memory for tpu_custom_call.1']
    #allocation6 [shape = 'u8[1024]{0}', space=vmem, size = 0x400, scoped, tag = 'output window, operand 1, single buffered']
    #allocation7 [shape = 's32[1]{0}', space=sflag, size = 0x4, scoped, tag = 'scoped memory for tpu_custom_call.1']
    #allocation8 [shape = 'u8[65536]{0}', space=vmem, size = 0x10000, scoped, tag = 'output window, operand 2']
    #allocation9 [shape = 'u8[1024]{0}', space=vmem, size = 0x400, scoped, tag = 'output window, operand 3, single buffered']
    %13 = vsyncpa [#allocation5], 0
    %s14 = scalar_lea.sflag [#allocation5], 1
    %15 = vsyncpa %s14, 0
    %16 = vsyncpa [#allocation7], 0
    loop: start=0, step=1, limit=4
    $region2: #{tpu_custom_call.1} parent=1 // loop_pre_header
      _
    $region3: #{tpu_custom_call.1} parent=1 // loop_header
      %s18 = sphi 0, %s22
      %p19 = scmp.ge.s32.totalorder %s18, 4
      %s28 = sphi 0, %s30
      %s31 = sphi 0, %s28
      %s32 = sphi 0, %s31
      %s48 = sphi 0, %s32
      %s52 = sphi 0, %s52
      %s54 = sphi 0, %s52
      %s55 = sphi 0, %s54
      %s69 = sphi 0, %s55
      %s75 = sphi 0, %s77
      %s78 = sphi 0, %s75
      %s79 = sphi 0, %s78
      %s95 = sphi 0, %s79
      %s99 = sphi 0, %s99
      %s101 = sphi 0, %s99
      %s102 = sphi 0, %s101
      %s116 = sphi 0, %s102
      %s122 = sphi 0, %s124
      %s125 = sphi 0, %s122
      %s126 = sphi 0, %s125
      %s142 = sphi 0, %s126
      %s146 = sphi 0, %s146
      %s148 = sphi 0, %s146
      %s149 = sphi 0, %s148
      %s163 = sphi 0, %s149
      %s169 = sphi 0, %s171
      %s172 = sphi 0, %s169
      %s173 = sphi 0, %s172
      %s189 = sphi 0, %s173
      %s193 = sphi 0, %s193
      %s195 = sphi 0, %s193
      %s196 = sphi 0, %s195
      %s210 = sphi 0, %s196
    $region4: #{tpu_custom_call.1} parent=1 // loop_header_branch
      %21 = sbr.rel (%p19) target = $region8
    $region5: #{tpu_custom_call.1} parent=1 // loop_body
      %s23 = ssub.s32 %s18, 1
      %s24 = ssub.s32 %s18, 2
      %s25 = sadd.s32 %s18, 1
      %s26 = ssub.s32 %s18, %s25
      %p27 = scmp.eq.s32.totalorder %s26, 0
      %s29 = sadd.s32 %s28, 1
      %s30 = scalar_select %p27, %s28, %s29
      %p33 = pneg %p27
      %p34 = scmp.eq.s32.totalorder %s18, 1
      %p35 = por %p33, %p34
      %p36 = scmp.ne.s32.totalorder %s28, %s31
      %p37 = scmp.eq.s32.totalorder %s18, 0
      %p38 = por %p36, %p37
      %p39 = scmp.ne.s32.totalorder %s28, %s31
      %p40 = scmp.eq.s32.totalorder %s23, 1
      %p41 = por %p39, %p40
      %p42 = scmp.ne.s32.totalorder %s31, %s32
      %p43 = scmp.eq.s32.totalorder %s23, 0
      %p44 = por %p42, %p43
      %p45 = scmp.ne.s32.totalorder %s31, %s32
      %p46 = scmp.eq.s32.totalorder %s24, 1
      %p47 = por %p45, %p46
      %p49 = scmp.ne.s32.totalorder %s32, %s48
      %p50 = scmp.eq.s32.totalorder %s24, 0
      %p51 = por %p49, %p50
      %s53 = sadd.s32 %s52, 1
      %p56 = scmp.eq.s32.totalorder %s18, 1
      %p57 = scmp.ne.s32.totalorder %s52, %s54
      %p58 = scmp.eq.s32.totalorder %s18, 0
      %p59 = por %p57, %p58
      %p60 = scmp.ne.s32.totalorder %s52, %s54
      %p61 = scmp.eq.s32.totalorder %s23, 1
      %p62 = por %p60, %p61
      %p63 = scmp.ne.s32.totalorder %s54, %s55
      %p64 = scmp.eq.s32.totalorder %s23, 0
      %p65 = por %p63, %p64
      %p66 = scmp.ne.s32.totalorder %s54, %s55
      %p67 = scmp.eq.s32.totalorder %s24, 1
      %p68 = por %p66, %p67
      %p70 = scmp.ne.s32.totalorder %s55, %s69
      %p71 = scmp.eq.s32.totalorder %s24, 0
      %p72 = por %p70, %p71
      %s73 = ssub.s32 %s18, %s25
      %p74 = scmp.eq.s32.totalorder %s73, 0
      %s76 = sadd.s32 %s75, 1
      %s77 = scalar_select %p74, %s75, %s76
      %p80 = pneg %p74
      %p81 = scmp.eq.s32.totalorder %s18, 1
      %p82 = por %p80, %p81
      %p83 = scmp.ne.s32.totalorder %s75, %s78
      %p84 = scmp.eq.s32.totalorder %s18, 0
      %p85 = por %p83, %p84
      %p86 = scmp.ne.s32.totalorder %s75, %s78
      %p87 = scmp.eq.s32.totalorder %s23, 1
      %p88 = por %p86, %p87
      %p89 = scmp.ne.s32.totalorder %s78, %s79
      %p90 = scmp.eq.s32.totalorder %s23, 0
      %p91 = por %p89, %p90
      %p92 = scmp.ne.s32.totalorder %s78, %s79
      %p93 = scmp.eq.s32.totalorder %s24, 1
      %p94 = por %p92, %p93
      %p96 = scmp.ne.s32.totalorder %s79, %s95
      %p97 = scmp.eq.s32.totalorder %s24, 0
      %p98 = por %p96, %p97
      %s100 = sadd.s32 %s99, 1
      %p103 = scmp.eq.s32.totalorder %s18, 1
      %p104 = scmp.ne.s32.totalorder %s99, %s101
      %p105 = scmp.eq.s32.totalorder %s18, 0
      %p106 = por %p104, %p105
      %p107 = scmp.ne.s32.totalorder %s99, %s101
      %p108 = scmp.eq.s32.totalorder %s23, 1
      %p109 = por %p107, %p108
      %p110 = scmp.ne.s32.totalorder %s101, %s102
      %p111 = scmp.eq.s32.totalorder %s23, 0
      %p112 = por %p110, %p111
      %p113 = scmp.ne.s32.totalorder %s101, %s102
      %p114 = scmp.eq.s32.totalorder %s24, 1
      %p115 = por %p113, %p114
      %p117 = scmp.ne.s32.totalorder %s102, %s116
      %p118 = scmp.eq.s32.totalorder %s24, 0
      %p119 = por %p117, %p118
      %s120 = ssub.s32 %s18, %s25
      %p121 = scmp.eq.s32.totalorder %s120, 0
      %s123 = sadd.s32 %s122, 1
      %s124 = scalar_select %p121, %s122, %s123
      %p127 = pneg %p121
      %p128 = scmp.eq.s32.totalorder %s18, 1
      %p129 = por %p127, %p128
      %p130 = scmp.ne.s32.totalorder %s122, %s125
      %p131 = scmp.eq.s32.totalorder %s18, 0
      %p132 = por %p130, %p131
      %p133 = scmp.ne.s32.totalorder %s122, %s125
      %p134 = scmp.eq.s32.totalorder %s23, 1
      %p135 = por %p133, %p134
      %p136 = scmp.ne.s32.totalorder %s125, %s126
      %p137 = scmp.eq.s32.totalorder %s23, 0
      %p138 = por %p136, %p137
      %p139 = scmp.ne.s32.totalorder %s125, %s126
      %p140 = scmp.eq.s32.totalorder %s24, 1
      %p141 = por %p139, %p140
      %p143 = scmp.ne.s32.totalorder %s126, %s142
      %p144 = scmp.eq.s32.totalorder %s24, 0
      %p145 = por %p143, %p144
      %s147 = sadd.s32 %s146, 1
      %p150 = scmp.eq.s32.totalorder %s18, 1
      %p151 = scmp.ne.s32.totalorder %s146, %s148
      %p152 = scmp.eq.s32.totalorder %s18, 0
      %p153 = por %p151, %p152
      %p154 = scmp.ne.s32.totalorder %s146, %s148
      %p155 = scmp.eq.s32.totalorder %s23, 1
      %p156 = por %p154, %p155
      %p157 = scmp.ne.s32.totalorder %s148, %s149
      %p158 = scmp.eq.s32.totalorder %s23, 0
      %p159 = por %p157, %p158
      %p160 = scmp.ne.s32.totalorder %s148, %s149
      %p161 = scmp.eq.s32.totalorder %s24, 1
      %p162 = por %p160, %p161
      %p164 = scmp.ne.s32.totalorder %s149, %s163
      %p165 = scmp.eq.s32.totalorder %s24, 0
      %p166 = por %p164, %p165
      %s167 = ssub.s32 %s18, %s25
      %p168 = scmp.eq.s32.totalorder %s167, 0
      %s170 = sadd.s32 %s169, 1
      %s171 = scalar_select %p168, %s169, %s170
      %p174 = pneg %p168
      %p175 = scmp.eq.s32.totalorder %s18, 1
      %p176 = por %p174, %p175
      %p177 = scmp.ne.s32.totalorder %s169, %s172
      %p178 = scmp.eq.s32.totalorder %s18, 0
      %p179 = por %p177, %p178
      %p180 = scmp.ne.s32.totalorder %s169, %s172
      %p181 = scmp.eq.s32.totalorder %s23, 1
      %p182 = por %p180, %p181
      %p183 = scmp.ne.s32.totalorder %s172, %s173
      %p184 = scmp.eq.s32.totalorder %s23, 0
      %p185 = por %p183, %p184
      %p186 = scmp.ne.s32.totalorder %s172, %s173
      %p187 = scmp.eq.s32.totalorder %s24, 1
      %p188 = por %p186, %p187
      %p190 = scmp.ne.s32.totalorder %s173, %s189
      %p191 = scmp.eq.s32.totalorder %s24, 0
      %p192 = por %p190, %p191
      %s194 = sadd.s32 %s193, 1
      %p197 = scmp.eq.s32.totalorder %s18, 1
      %p198 = scmp.ne.s32.totalorder %s193, %s195
      %p199 = scmp.eq.s32.totalorder %s18, 0
      %p200 = por %p198, %p199
      %p201 = scmp.ne.s32.totalorder %s193, %s195
      %p202 = scmp.eq.s32.totalorder %s23, 1
      %p203 = por %p201, %p202
      %p204 = scmp.ne.s32.totalorder %s195, %s196
      %p205 = scmp.eq.s32.totalorder %s23, 0
      %p206 = por %p204, %p205
      %p207 = scmp.ne.s32.totalorder %s195, %s196
      %p208 = scmp.eq.s32.totalorder %s24, 1
      %p209 = por %p207, %p208
      %p211 = scmp.ne.s32.totalorder %s196, %s210
      %p212 = scmp.eq.s32.totalorder %s24, 0
      %p213 = por %p211, %p212
      %p214 = scmp.le.s32.totalorder 1, %s18
      %p215 = scmp.lt.s32.totalorder %s18, 3
      %p216 = pnand %p214, %p215
      %p217 = pneg %p216
      // Predicated region
      $region9: #{tpu_custom_call.1} parent=5 // pred_check
        _
      $region10: #{tpu_custom_call.1} parent=5 // pred_check_branch
        %219 = sbr.rel (%p216) target = $region12
      $region11: #{tpu_custom_call.1} parent=5 // pred_region
        %s220 = ssub.s32 %s18, 1
        // Predicated region
        $region13: #{tpu_custom_call.1} parent=11 // pred_check
          %p221 = pneg %p65
        $region14: #{tpu_custom_call.1} parent=11 // pred_check_branch
          %223 = sbr.rel (%p221) target = $region16
        $region15: #{tpu_custom_call.1} parent=11 // pred_region
          _
        $region16: #{tpu_custom_call.1} parent=11 // pred_fallthru
          _
        // Predicated region
        $region17: #{tpu_custom_call.1} parent=11 // pred_check
          %p224 = pneg %p112
        $region18: #{tpu_custom_call.1} parent=11 // pred_check_branch
          %226 = sbr.rel (%p224) target = $region20
        $region19: #{tpu_custom_call.1} parent=11 // pred_region
          _
        $region20: #{tpu_custom_call.1} parent=11 // pred_fallthru
          _
      $region12: #{tpu_custom_call.1} parent=5 // pred_fallthru
        _
      %p227 = scmp.lt.s32.totalorder %s18, 2
      // Predicated region
      $region21: #{tpu_custom_call.1} parent=5 // pred_check
        %p228 = pneg %p227
      $region22: #{tpu_custom_call.1} parent=5 // pred_check_branch
        %230 = sbr.rel (%p228) target = $region24
      $region23: #{tpu_custom_call.1} parent=5 // pred_region
        // Predicated region
        $region25: #{tpu_custom_call.1} parent=23 // pred_check
          %p231 = pneg %p38
        $region26: #{tpu_custom_call.1} parent=23 // pred_check_branch
          %233 = sbr.rel (%p231) target = $region28
        $region27: #{tpu_custom_call.1} parent=23 // pred_region
          %s234 = sand.u32 %s28, 1
          %s235 = sand.u32 %s28, 1
          %s236 = smul.addr %s235, 288
          %s237 = scalar_lea.vmem [#allocation3], %s236
          %s238 = smul.addr %s18, 18
          %s239 = smul.addr %s238, 4
          %s240 = scalar_lea.vmem %s0, %s239
          // Predicated region
          $region29: #{tpu_custom_call.1} parent=27 // pred_check
            _
          $region30: #{tpu_custom_call.1} parent=27 // pred_check_branch
            %242 = sbr.rel (0) target = $region32
          $region31: #{tpu_custom_call.1} parent=27 // pred_region
            // Predicated region
            $region33: #{tpu_custom_call.1} parent=31 // pred_check
              _
            $region34: #{tpu_custom_call.1} parent=31 // pred_check_branch
              %244 = sbr.rel target = $region36
            $region35: #{tpu_custom_call.1} parent=31 // pred_region
              // Predicated region
              $region48: #{tpu_custom_call.1} parent=35 // pred_check
                _
              $region49: #{tpu_custom_call.1} parent=35 // pred_check_branch
                %401 = sbr.rel (0) target = $region51
              $region50: #{tpu_custom_call.1} parent=35 // pred_region
                loop: start=0, step=1, limit=1
                $region52: #{tpu_custom_call.1} parent=50 // loop_pre_header
                  _
                $region53: #{tpu_custom_call.1} parent=50 // loop_header
                  %s403 = sphi 0, %s407
                  %p404 = scmp.ge.s32.totalorder %s403, 1
                  %s408 = sphi %s240, %s240
                  %s409 = sphi %s237, %s237
                $region54: #{tpu_custom_call.1} parent=50 // loop_header_branch
                  %406 = sbr.rel (%p404) target = $region58
                $region55: #{tpu_custom_call.1} parent=50 // loop_body
                  _
                $region56: #{tpu_custom_call.1} parent=50 // loop_footer
                  %s407 = sadd.s32 1, %s403
                $region57: #{tpu_custom_call.1} parent=50 // loop_footer_branch
                  %402 = sbr.rel target = $region53
                $region58: #{tpu_custom_call.1} parent=50 // loop_exit
                  _
                loop: start=0, step=1, limit=1
                $region59: #{tpu_custom_call.1} parent=50 // loop_pre_header
                  _
                $region60: #{tpu_custom_call.1} parent=50 // loop_header
                  %s412 = sphi 0, %s416
                  %p413 = scmp.ge.s32.totalorder %s412, 1
                  %s417 = sphi %s240, %s240
                  %s418 = sphi %s237, %s237
                $region61: #{tpu_custom_call.1} parent=50 // loop_header_branch
                  %415 = sbr.rel (%p413) target = $region65
                $region62: #{tpu_custom_call.1} parent=50 // loop_body
                  %v419 = vld [vmem:[%s417] sm:$0xf]
                  %420 = vst [vmem:[%s418] sm:$0xf] %v419
                  %v421 = vld [vmem:[%s417 + $0x4] sm:$0xf]
                  %422 = vst [vmem:[%s418 + $0x4] sm:$0xf] %v421
                  %v423 = vld [vmem:[%s417 + $0x8] sm:$0xf]
                  %424 = vst [vmem:[%s418 + $0x8] sm:$0xf] %v423
                  %v425 = vld [vmem:[%s417 + $0xc] sm:$0xf]
                  %426 = vst [vmem:[%s418 + $0xc] sm:$0xf] %v425
                  %v427 = vld [vmem:[%s417 + $0x10] sm:$0xf]
                  %428 = vst [vmem:[%s418 + $0x10] sm:$0xf] %v427
                  %v429 = vld [vmem:[%s417 + $0x14] sm:$0xf]
                  %430 = vst [vmem:[%s418 + $0x14] sm:$0xf] %v429
                  %v431 = vld [vmem:[%s417 + $0x18] sm:$0xf]
                  %432 = vst [vmem:[%s418 + $0x18] sm:$0xf] %v431
                  %v433 = vld [vmem:[%s417 + $0x1c] sm:$0xf]
                  %434 = vst [vmem:[%s418 + $0x1c] sm:$0xf] %v433
                  %v435 = vld [vmem:[%s417 + $0x20] sm:$0xf]
                  %436 = vst [vmem:[%s418 + $0x20] sm:$0xf] %v435
                  %v437 = vld [vmem:[%s417 + $0x24] sm:$0xf]
                  %438 = vst [vmem:[%s418 + $0x24] sm:$0xf] %v437
                  %v439 = vld [vmem:[%s417 + $0x28] sm:$0xf]
                  %440 = vst [vmem:[%s418 + $0x28] sm:$0xf] %v439
                  %v441 = vld [vmem:[%s417 + $0x2c] sm:$0xf]
                  %442 = vst [vmem:[%s418 + $0x2c] sm:$0xf] %v441
                  %v443 = vld [vmem:[%s417 + $0x30] sm:$0xf]
                  %444 = vst [vmem:[%s418 + $0x30] sm:$0xf] %v443
                  %v445 = vld [vmem:[%s417 + $0x34] sm:$0xf]
                  %446 = vst [vmem:[%s418 + $0x34] sm:$0xf] %v445
                  %v447 = vld [vmem:[%s417 + $0x38] sm:$0xf]
                  %448 = vst [vmem:[%s418 + $0x38] sm:$0xf] %v447
                  %v449 = vld [vmem:[%s417 + $0x3c] sm:$0xf]
                  %450 = vst [vmem:[%s418 + $0x3c] sm:$0xf] %v449
                  %v451 = vld [vmem:[%s417 + $0x40] sm:$0xf]
                  %452 = vst [vmem:[%s418 + $0x40] sm:$0xf] %v451
                  %v453 = vld [vmem:[%s417 + $0x44] sm:$0xf]
                  %454 = vst [vmem:[%s418 + $0x44] sm:$0xf] %v453
                  %v455 = vld [vmem:[%s417 + $0x90] sm:$0xf]
                  %456 = vst [vmem:[%s418 + $0x48] sm:$0xf] %v455
                  %v457 = vld [vmem:[%s417 + $0x94] sm:$0xf]
                  %458 = vst [vmem:[%s418 + $0x4c] sm:$0xf] %v457
                  %v459 = vld [vmem:[%s417 + $0x98] sm:$0xf]
                  %460 = vst [vmem:[%s418 + $0x50] sm:$0xf] %v459
                  %v461 = vld [vmem:[%s417 + $0x9c] sm:$0xf]
                  %462 = vst [vmem:[%s418 + $0x54] sm:$0xf] %v461
                  %v463 = vld [vmem:[%s417 + $0xa0] sm:$0xf]
                  %464 = vst [vmem:[%s418 + $0x58] sm:$0xf] %v463
                  %v465 = vld [vmem:[%s417 + $0xa4] sm:$0xf]
                  %466 = vst [vmem:[%s418 + $0x5c] sm:$0xf] %v465
                  %v467 = vld [vmem:[%s417 + $0xa8] sm:$0xf]
                  %468 = vst [vmem:[%s418 + $0x60] sm:$0xf] %v467
                  %v469 = vld [vmem:[%s417 + $0xac] sm:$0xf]
                  %470 = vst [vmem:[%s418 + $0x64] sm:$0xf] %v469
                  %v471 = vld [vmem:[%s417 + $0xb0] sm:$0xf]
                  %472 = vst [vmem:[%s418 + $0x68] sm:$0xf] %v471
                  %v473 = vld [vmem:[%s417 + $0xb4] sm:$0xf]
                  %474 = vst [vmem:[%s418 + $0x6c] sm:$0xf] %v473
                  %v475 = vld [vmem:[%s417 + $0xb8] sm:$0xf]
                  %476 = vst [vmem:[%s418 + $0x70] sm:$0xf] %v475
                  %v477 = vld [vmem:[%s417 + $0xbc] sm:$0xf]
                  %478 = vst [vmem:[%s418 + $0x74] sm:$0xf] %v477
                  %v479 = vld [vmem:[%s417 + $0xc0] sm:$0xf]
                  %480 = vst [vmem:[%s418 + $0x78] sm:$0xf] %v479
                  %v481 = vld [vmem:[%s417 + $0xc4] sm:$0xf]
                  %482 = vst [vmem:[%s418 + $0x7c] sm:$0xf] %v481
                  %v483 = vld [vmem:[%s417 + $0xc8] sm:$0xf]
                  %484 = vst [vmem:[%s418 + $0x80] sm:$0xf] %v483
                  %v485 = vld [vmem:[%s417 + $0xcc] sm:$0xf]
                  %486 = vst [vmem:[%s418 + $0x84] sm:$0xf] %v485
                  %v487 = vld [vmem:[%s417 + $0xd0] sm:$0xf]
                  %488 = vst [vmem:[%s418 + $0x88] sm:$0xf] %v487
                  %v489 = vld [vmem:[%s417 + $0xd4] sm:$0xf]
                  %490 = vst [vmem:[%s418 + $0x8c] sm:$0xf] %v489
                  %v491 = vld [vmem:[%s417 + $0x120] sm:$0xf]
                  %492 = vst [vmem:[%s418 + $0x90] sm:$0xf] %v491
                  %v493 = vld [vmem:[%s417 + $0x124] sm:$0xf]
                  %494 = vst [vmem:[%s418 + $0x94] sm:$0xf] %v493
                  %v495 = vld [vmem:[%s417 + $0x128] sm:$0xf]
                  %496 = vst [vmem:[%s418 + $0x98] sm:$0xf] %v495
                  %v497 = vld [vmem:[%s417 + $0x12c] sm:$0xf]
                  %498 = vst [vmem:[%s418 + $0x9c] sm:$0xf] %v497
                  %v499 = vld [vmem:[%s417 + $0x130] sm:$0xf]
                  %500 = vst [vmem:[%s418 + $0xa0] sm:$0xf] %v499
                  %v501 = vld [vmem:[%s417 + $0x134] sm:$0xf]
                  %502 = vst [vmem:[%s418 + $0xa4] sm:$0xf] %v501
                  %v503 = vld [vmem:[%s417 + $0x138] sm:$0xf]
                  %504 = vst [vmem:[%s418 + $0xa8] sm:$0xf] %v503
                  %v505 = vld [vmem:[%s417 + $0x13c] sm:$0xf]
                  %506 = vst [vmem:[%s418 + $0xac] sm:$0xf] %v505
                  %v507 = vld [vmem:[%s417 + $0x140] sm:$0xf]
                  %508 = vst [vmem:[%s418 + $0xb0] sm:$0xf] %v507
                  %v509 = vld [vmem:[%s417 + $0x144] sm:$0xf]
                  %510 = vst [vmem:[%s418 + $0xb4] sm:$0xf] %v509
                  %v511 = vld [vmem:[%s417 + $0x148] sm:$0xf]
                  %512 = vst [vmem:[%s418 + $0xb8] sm:$0xf] %v511
                  %v513 = vld [vmem:[%s417 + $0x14c] sm:$0xf]
                  %514 = vst [vmem:[%s418 + $0xbc] sm:$0xf] %v513
                  %v515 = vld [vmem:[%s417 + $0x150] sm:$0xf]
                  %516 = vst [vmem:[%s418 + $0xc0] sm:$0xf] %v515
                  %v517 = vld [vmem:[%s417 + $0x154] sm:$0xf]
                  %518 = vst [vmem:[%s418 + $0xc4] sm:$0xf] %v517
                  %v519 = vld [vmem:[%s417 + $0x158] sm:$0xf]
                  %520 = vst [vmem:[%s418 + $0xc8] sm:$0xf] %v519
                  %v521 = vld [vmem:[%s417 + $0x15c] sm:$0xf]
                  %522 = vst [vmem:[%s418 + $0xcc] sm:$0xf] %v521
                  %v523 = vld [vmem:[%s417 + $0x160] sm:$0xf]
                  %524 = vst [vmem:[%s418 + $0xd0] sm:$0xf] %v523
                  %v525 = vld [vmem:[%s417 + $0x164] sm:$0xf]
                  %526 = vst [vmem:[%s418 + $0xd4] sm:$0xf] %v525
                  %v527 = vld [vmem:[%s417 + $0x1b0] sm:$0xf]
                  %528 = vst [vmem:[%s418 + $0xd8] sm:$0xf] %v527
                  %v529 = vld [vmem:[%s417 + $0x1b4] sm:$0xf]
                  %530 = vst [vmem:[%s418 + $0xdc] sm:$0xf] %v529
                  %v531 = vld [vmem:[%s417 + $0x1b8] sm:$0xf]
                  %532 = vst [vmem:[%s418 + $0xe0] sm:$0xf] %v531
                  %v533 = vld [vmem:[%s417 + $0x1bc] sm:$0xf]
                  %534 = vst [vmem:[%s418 + $0xe4] sm:$0xf] %v533
                  %v535 = vld [vmem:[%s417 + $0x1c0] sm:$0xf]
                  %536 = vst [vmem:[%s418 + $0xe8] sm:$0xf] %v535
                  %v537 = vld [vmem:[%s417 + $0x1c4] sm:$0xf]
                  %538 = vst [vmem:[%s418 + $0xec] sm:$0xf] %v537
                  %v539 = vld [vmem:[%s417 + $0x1c8] sm:$0xf]
                  %540 = vst [vmem:[%s418 + $0xf0] sm:$0xf] %v539
                  %v541 = vld [vmem:[%s417 + $0x1cc] sm:$0xf]
                  %542 = vst [vmem:[%s418 + $0xf4] sm:$0xf] %v541
                  %v543 = vld [vmem:[%s417 + $0x1d0] sm:$0xf]
                  %544 = vst [vmem:[%s418 + $0xf8] sm:$0xf] %v543
                  %v545 = vld [vmem:[%s417 + $0x1d4] sm:$0xf]
                  %546 = vst [vmem:[%s418 + $0xfc] sm:$0xf] %v545
                  %v547 = vld [vmem:[%s417 + $0x1d8] sm:$0xf]
                  %548 = vst [vmem:[%s418 + $0x100] sm:$0xf] %v547
                  %v549 = vld [vmem:[%s417 + $0x1dc] sm:$0xf]
                  %550 = vst [vmem:[%s418 + $0x104] sm:$0xf] %v549
                  %v551 = vld [vmem:[%s417 + $0x1e0] sm:$0xf]
                  %552 = vst [vmem:[%s418 + $0x108] sm:$0xf] %v551
                  %v553 = vld [vmem:[%s417 + $0x1e4] sm:$0xf]
                  %554 = vst [vmem:[%s418 + $0x10c] sm:$0xf] %v553
                  %v555 = vld [vmem:[%s417 + $0x1e8] sm:$0xf]
                  %556 = vst [vmem:[%s418 + $0x110] sm:$0xf] %v555
                  %v557 = vld [vmem:[%s417 + $0x1ec] sm:$0xf]
                  %558 = vst [vmem:[%s418 + $0x114] sm:$0xf] %v557
                  %v559 = vld [vmem:[%s417 + $0x1f0] sm:$0xf]
                  %560 = vst [vmem:[%s418 + $0x118] sm:$0xf] %v559
                  %v561 = vld [vmem:[%s417 + $0x1f4] sm:$0xf]
                  %562 = vst [vmem:[%s418 + $0x11c] sm:$0xf] %v561
                $region63: #{tpu_custom_call.1} parent=50 // loop_footer
                  %s416 = sadd.s32 1, %s412
                $region64: #{tpu_custom_call.1} parent=50 // loop_footer_branch
                  %411 = sbr.rel target = $region60
                $region65: #{tpu_custom_call.1} parent=50 // loop_exit
                  _
              $region51: #{tpu_custom_call.1} parent=35 // pred_fallthru
                _
            $region36: #{tpu_custom_call.1} parent=31 // pred_fallthru
              _
            // Predicated region
            $region37: #{tpu_custom_call.1} parent=31 // pred_check
              _
            $region38: #{tpu_custom_call.1} parent=31 // pred_check_branch
              %246 = sbr.rel (0) target = $region40
            $region39: #{tpu_custom_call.1} parent=31 // pred_region
              loop: start=0, step=1, limit=1
              $region41: #{tpu_custom_call.1} parent=39 // loop_pre_header
                _
              $region42: #{tpu_custom_call.1} parent=39 // loop_header
                %s249 = sphi 0, %s253
                %p250 = scmp.ge.s32.totalorder %s249, 1
                %s254 = sphi %s240, %s240
                %s255 = sphi %s237, %s237
              $region43: #{tpu_custom_call.1} parent=39 // loop_header_branch
                %252 = sbr.rel (%p250) target = $region47
              $region44: #{tpu_custom_call.1} parent=39 // loop_body
                %v256 = vld [vmem:[%s254] sm:$0xf]
                %257 = vst [vmem:[%s255] sm:$0xf] %v256
                %v258 = vld [vmem:[%s254 + $0x4] sm:$0xf]
                %259 = vst [vmem:[%s255 + $0x4] sm:$0xf] %v258
                %v260 = vld [vmem:[%s254 + $0x8] sm:$0xf]
                %261 = vst [vmem:[%s255 + $0x8] sm:$0xf] %v260
                %v262 = vld [vmem:[%s254 + $0xc] sm:$0xf]
                %263 = vst [vmem:[%s255 + $0xc] sm:$0xf] %v262
                %v264 = vld [vmem:[%s254 + $0x10] sm:$0xf]
                %265 = vst [vmem:[%s255 + $0x10] sm:$0xf] %v264
                %v266 = vld [vmem:[%s254 + $0x14] sm:$0xf]
                %267 = vst [vmem:[%s255 + $0x14] sm:$0xf] %v266
                %v268 = vld [vmem:[%s254 + $0x18] sm:$0xf]
                %269 = vst [vmem:[%s255 + $0x18] sm:$0xf] %v268
                %v270 = vld [vmem:[%s254 + $0x1c] sm:$0xf]
                %271 = vst [vmem:[%s255 + $0x1c] sm:$0xf] %v270
                %v272 = vld [vmem:[%s254 + $0x20] sm:$0xf]
                %273 = vst [vmem:[%s255 + $0x20] sm:$0xf] %v272
                %v274 = vld [vmem:[%s254 + $0x24] sm:$0xf]
                %275 = vst [vmem:[%s255 + $0x24] sm:$0xf] %v274
                %v276 = vld [vmem:[%s254 + $0x28] sm:$0xf]
                %277 = vst [vmem:[%s255 + $0x28] sm:$0xf] %v276
                %v278 = vld [vmem:[%s254 + $0x2c] sm:$0xf]
                %279 = vst [vmem:[%s255 + $0x2c] sm:$0xf] %v278
                %v280 = vld [vmem:[%s254 + $0x30] sm:$0xf]
                %281 = vst [vmem:[%s255 + $0x30] sm:$0xf] %v280
                %v282 = vld [vmem:[%s254 + $0x34] sm:$0xf]
                %283 = vst [vmem:[%s255 + $0x34] sm:$0xf] %v282
                %v284 = vld [vmem:[%s254 + $0x38] sm:$0xf]
                %285 = vst [vmem:[%s255 + $0x38] sm:$0xf] %v284
                %v286 = vld [vmem:[%s254 + $0x3c] sm:$0xf]
                %287 = vst [vmem:[%s255 + $0x3c] sm:$0xf] %v286
                %v288 = vld [vmem:[%s254 + $0x40] sm:$0xf]
                %289 = vst [vmem:[%s255 + $0x40] sm:$0xf] %v288
                %v290 = vld [vmem:[%s254 + $0x44] sm:$0xf]
                %291 = vst [vmem:[%s255 + $0x44] sm:$0xf] %v290
                %v292 = vld [vmem:[%s254 + $0x90] sm:$0xf]
                %293 = vst [vmem:[%s255 + $0x48] sm:$0xf] %v292
                %v294 = vld [vmem:[%s254 + $0x94] sm:$0xf]
                %295 = vst [vmem:[%s255 + $0x4c] sm:$0xf] %v294
                %v296 = vld [vmem:[%s254 + $0x98] sm:$0xf]
                %297 = vst [vmem:[%s255 + $0x50] sm:$0xf] %v296
                %v298 = vld [vmem:[%s254 + $0x9c] sm:$0xf]
                %299 = vst [vmem:[%s255 + $0x54] sm:$0xf] %v298
                %v300 = vld [vmem:[%s254 + $0xa0] sm:$0xf]
                %301 = vst [vmem:[%s255 + $0x58] sm:$0xf] %v300
                %v302 = vld [vmem:[%s254 + $0xa4] sm:$0xf]
                %303 = vst [vmem:[%s255 + $0x5c] sm:$0xf] %v302
                %v304 = vld [vmem:[%s254 + $0xa8] sm:$0xf]
                %305 = vst [vmem:[%s255 + $0x60] sm:$0xf] %v304
                %v306 = vld [vmem:[%s254 + $0xac] sm:$0xf]
                %307 = vst [vmem:[%s255 + $0x64] sm:$0xf] %v306
                %v308 = vld [vmem:[%s254 + $0xb0] sm:$0xf]
                %309 = vst [vmem:[%s255 + $0x68] sm:$0xf] %v308
                %v310 = vld [vmem:[%s254 + $0xb4] sm:$0xf]
                %311 = vst [vmem:[%s255 + $0x6c] sm:$0xf] %v310
                %v312 = vld [vmem:[%s254 + $0xb8] sm:$0xf]
                %313 = vst [vmem:[%s255 + $0x70] sm:$0xf] %v312
                %v314 = vld [vmem:[%s254 + $0xbc] sm:$0xf]
                %315 = vst [vmem:[%s255 + $0x74] sm:$0xf] %v314
                %v316 = vld [vmem:[%s254 + $0xc0] sm:$0xf]
                %317 = vst [vmem:[%s255 + $0x78] sm:$0xf] %v316
                %v318 = vld [vmem:[%s254 + $0xc4] sm:$0xf]
                %319 = vst [vmem:[%s255 + $0x7c] sm:$0xf] %v318
                %v320 = vld [vmem:[%s254 + $0xc8] sm:$0xf]
                %321 = vst [vmem:[%s255 + $0x80] sm:$0xf] %v320
                %v322 = vld [vmem:[%s254 + $0xcc] sm:$0xf]
                %323 = vst [vmem:[%s255 + $0x84] sm:$0xf] %v322
                %v324 = vld [vmem:[%s254 + $0xd0] sm:$0xf]
                %325 = vst [vmem:[%s255 + $0x88] sm:$0xf] %v324
                %v326 = vld [vmem:[%s254 + $0xd4] sm:$0xf]
                %327 = vst [vmem:[%s255 + $0x8c] sm:$0xf] %v326
                %v328 = vld [vmem:[%s254 + $0x120] sm:$0xf]
                %329 = vst [vmem:[%s255 + $0x90] sm:$0xf] %v328
                %v330 = vld [vmem:[%s254 + $0x124] sm:$0xf]
                %331 = vst [vmem:[%s255 + $0x94] sm:$0xf] %v330
                %v332 = vld [vmem:[%s254 + $0x128] sm:$0xf]
                %333 = vst [vmem:[%s255 + $0x98] sm:$0xf] %v332
                %v334 = vld [vmem:[%s254 + $0x12c] sm:$0xf]
                %335 = vst [vmem:[%s255 + $0x9c] sm:$0xf] %v334
                %v336 = vld [vmem:[%s254 + $0x130] sm:$0xf]
                %337 = vst [vmem:[%s255 + $0xa0] sm:$0xf] %v336
                %v338 = vld [vmem:[%s254 + $0x134] sm:$0xf]
                %339 = vst [vmem:[%s255 + $0xa4] sm:$0xf] %v338
                %v340 = vld [vmem:[%s254 + $0x138] sm:$0xf]
                %341 = vst [vmem:[%s255 + $0xa8] sm:$0xf] %v340
                %v342 = vld [vmem:[%s254 + $0x13c] sm:$0xf]
                %343 = vst [vmem:[%s255 + $0xac] sm:$0xf] %v342
                %v344 = vld [vmem:[%s254 + $0x140] sm:$0xf]
                %345 = vst [vmem:[%s255 + $0xb0] sm:$0xf] %v344
                %v346 = vld [vmem:[%s254 + $0x144] sm:$0xf]
                %347 = vst [vmem:[%s255 + $0xb4] sm:$0xf] %v346
                %v348 = vld [vmem:[%s254 + $0x148] sm:$0xf]
                %349 = vst [vmem:[%s255 + $0xb8] sm:$0xf] %v348
                %v350 = vld [vmem:[%s254 + $0x14c] sm:$0xf]
                %351 = vst [vmem:[%s255 + $0xbc] sm:$0xf] %v350
                %v352 = vld [vmem:[%s254 + $0x150] sm:$0xf]
                %353 = vst [vmem:[%s255 + $0xc0] sm:$0xf] %v352
                %v354 = vld [vmem:[%s254 + $0x154] sm:$0xf]
                %355 = vst [vmem:[%s255 + $0xc4] sm:$0xf] %v354
                %v356 = vld [vmem:[%s254 + $0x158] sm:$0xf]
                %357 = vst [vmem:[%s255 + $0xc8] sm:$0xf] %v356
                %v358 = vld [vmem:[%s254 + $0x15c] sm:$0xf]
                %359 = vst [vmem:[%s255 + $0xcc] sm:$0xf] %v358
                %v360 = vld [vmem:[%s254 + $0x160] sm:$0xf]
                %361 = vst [vmem:[%s255 + $0xd0] sm:$0xf] %v360
                %v362 = vld [vmem:[%s254 + $0x164] sm:$0xf]
                %363 = vst [vmem:[%s255 + $0xd4] sm:$0xf] %v362
                %v364 = vld [vmem:[%s254 + $0x1b0] sm:$0xf]
                %365 = vst [vmem:[%s255 + $0xd8] sm:$0xf] %v364
                %v366 = vld [vmem:[%s254 + $0x1b4] sm:$0xf]
                %367 = vst [vmem:[%s255 + $0xdc] sm:$0xf] %v366
                %v368 = vld [vmem:[%s254 + $0x1b8] sm:$0xf]
                %369 = vst [vmem:[%s255 + $0xe0] sm:$0xf] %v368
                %v370 = vld [vmem:[%s254 + $0x1bc] sm:$0xf]
                %371 = vst [vmem:[%s255 + $0xe4] sm:$0xf] %v370
                %v372 = vld [vmem:[%s254 + $0x1c0] sm:$0xf]
                %373 = vst [vmem:[%s255 + $0xe8] sm:$0xf] %v372
                %v374 = vld [vmem:[%s254 + $0x1c4] sm:$0xf]
                %375 = vst [vmem:[%s255 + $0xec] sm:$0xf] %v374
                %v376 = vld [vmem:[%s254 + $0x1c8] sm:$0xf]
                %377 = vst [vmem:[%s255 + $0xf0] sm:$0xf] %v376
                %v378 = vld [vmem:[%s254 + $0x1cc] sm:$0xf]
                %379 = vst [vmem:[%s255 + $0xf4] sm:$0xf] %v378
                %v380 = vld [vmem:[%s254 + $0x1d0] sm:$0xf]
                %381 = vst [vmem:[%s255 + $0xf8] sm:$0xf] %v380
                %v382 = vld [vmem:[%s254 + $0x1d4] sm:$0xf]
                %383 = vst [vmem:[%s255 + $0xfc] sm:$0xf] %v382
                %v384 = vld [vmem:[%s254 + $0x1d8] sm:$0xf]
                %385 = vst [vmem:[%s255 + $0x100] sm:$0xf] %v384
                %v386 = vld [vmem:[%s254 + $0x1dc] sm:$0xf]
                %387 = vst [vmem:[%s255 + $0x104] sm:$0xf] %v386
                %v388 = vld [vmem:[%s254 + $0x1e0] sm:$0xf]
                %389 = vst [vmem:[%s255 + $0x108] sm:$0xf] %v388
                %v390 = vld [vmem:[%s254 + $0x1e4] sm:$0xf]
                %391 = vst [vmem:[%s255 + $0x10c] sm:$0xf] %v390
                %v392 = vld [vmem:[%s254 + $0x1e8] sm:$0xf]
                %393 = vst [vmem:[%s255 + $0x110] sm:$0xf] %v392
                %v394 = vld [vmem:[%s254 + $0x1ec] sm:$0xf]
                %395 = vst [vmem:[%s255 + $0x114] sm:$0xf] %v394
                %v396 = vld [vmem:[%s254 + $0x1f0] sm:$0xf]
                %397 = vst [vmem:[%s255 + $0x118] sm:$0xf] %v396
                %v398 = vld [vmem:[%s254 + $0x1f4] sm:$0xf]
                %399 = vst [vmem:[%s255 + $0x11c] sm:$0xf] %v398
              $region45: #{tpu_custom_call.1} parent=39 // loop_footer
                %s253 = sadd.s32 1, %s249
              $region46: #{tpu_custom_call.1} parent=39 // loop_footer_branch
                %248 = sbr.rel target = $region42
              $region47: #{tpu_custom_call.1} parent=39 // loop_exit
                _
            $region40: #{tpu_custom_call.1} parent=31 // pred_fallthru
              _
          $region32: #{tpu_custom_call.1} parent=27 // pred_fallthru
            _
          %563 = vnop
        $region28: #{tpu_custom_call.1} parent=23 // pred_fallthru
          _
        // Predicated region
        $region66: #{tpu_custom_call.1} parent=23 // pred_check
          %p564 = pneg %p85
        $region67: #{tpu_custom_call.1} parent=23 // pred_check_branch
          %566 = sbr.rel (%p564) target = $region69
        $region68: #{tpu_custom_call.1} parent=23 // pred_region
          %p567 = scmp.lt.s32.totalorder %s18, 1
          %s568 = scalar_select %p567, %s18, 1
          %s569 = smul.addr %s568, 8
          %s570 = smul.addr %s569, 4
          %s571 = scalar_lea.vmem %s2, %s570
        $region69: #{tpu_custom_call.1} parent=23 // pred_fallthru
          _
      $region24: #{tpu_custom_call.1} parent=5 // pred_fallthru
        _
      %p572 = scmp.le.s32.totalorder 1, %s18
      %p573 = scmp.lt.s32.totalorder %s18, 3
      %p574 = pnand %p572, %p573
      %p575 = pneg %p574
      // Predicated region
      $region70: #{tpu_custom_call.1} parent=5 // pred_check
        _
      $region71: #{tpu_custom_call.1} parent=5 // pred_check_branch
        %577 = sbr.rel (%p574) target = $region73
      $region72: #{tpu_custom_call.1} parent=5 // pred_region
        %s578 = ssub.s32 %s18, 1
        %s579 = sand.u32 %s31, 1
        %s580 = sand.u32 %s31, 1
        %s581 = smul.addr %s580, 288
        %s582 = scalar_lea.vmem [#allocation3], %s581
        // Predicated region
        $region74: #{tpu_custom_call.1} parent=72 // pred_check
          %p583 = pneg %p44
        $region75: #{tpu_custom_call.1} parent=72 // pred_check_branch
          %585 = sbr.rel (%p583) target = $region77
        $region76: #{tpu_custom_call.1} parent=72 // pred_region
          _
        $region77: #{tpu_custom_call.1} parent=72 // pred_fallthru
          _
        %s586 = sand.u32 %s31, 1
        %s587 = sand.u32 %s31, 1
        %s588 = smul.addr %s587, 288
        %s589 = scalar_lea.vmem [#allocation3], %s588
        %p590 = pneg %p44
        %p591 = pneg %p41
        %p592 = pneg %p65
        %p593 = pneg %p62
        %p594 = scmp.lt.s32.totalorder %s23, 1
        %s595 = scalar_select %p594, %s23, 1
        %s596 = smul.addr %s595, 8
        %s597 = smul.addr %s596, 4
        %s598 = scalar_lea.vmem %s2, %s597
        %p599 = pneg %p91
        %p600 = pneg %p88
        %p601 = pneg %p112
        %p602 = pneg %p109
        %p603 = pneg %p138
        %p604 = pneg %p135
        %s605 = sand.u32 %s23, 1
        %s606 = scalar_lea.sflag [#allocation5], %s605
        %s607 = sand.u32 %s125, 1
        %s608 = smul.addr %s607, 32
        %s609 = scalar_lea.vmem [#allocation4], %s608
        %p610 = pneg %p159
        %p611 = pneg %p156
        %p612 = pneg %p185
        %p613 = pneg %p182
        %s614 = sand.u32 %s23, 1
        %s615 = scalar_lea.sflag [#allocation5], %s614
        %s616 = sand.u32 %s172, 1
        %s617 = smul.addr %s616, 64
        %s618 = scalar_lea.vmem [#allocation8], %s617
        %p619 = pneg %p206
        %p620 = pneg %p203
        %p621 = scmp.lt.s32.totalorder %s23, 1
        %s622 = scalar_select %p621, %s23, 1
        %s623 = smul.addr %s622, 8
        %s624 = smul.addr %s623, 4
        %s625 = scalar_lea.vmem %s2, %s624
        %p627 = scmp.eq.s32.totalorder %s23, 0
        %v628 = vld [vmem:[%s582] sm:$0xf]
        %v629 = vld [vmem:[%s582 + $0x8] sm:$0xf]
        %v630 = vld [vmem:[%s582 + $0x10] sm:$0xf]
        %v631 = vld [vmem:[%s582 + $0x18] sm:$0xf]
        %v632 = vld [vmem:[%s582 + $0x20] sm:$0xf]
        %v633 = vld [vmem:[%s582 + $0x28] sm:$0xf]
        %v634 = vld [vmem:[%s582 + $0x30] sm:$0xf]
        %v635 = vld [vmem:[%s582 + $0x38] sm:$0xf]
        %v644 = vunpack.c.l.b16 %v628
        %v645 = vunpack.c.l.b16 %v629
        %v646 = vunpack.c.l.b16 %v630
        %v647 = vunpack.c.l.b16 %v631
        %v648 = vunpack.c.l.b16 %v632
        %v649 = vunpack.c.l.b16 %v633
        %v650 = vunpack.c.l.b16 %v634
        %v651 = vunpack.c.l.b16 %v635
        %v652 = vpack.c.b16 %v645, %v644
        %v653 = vpack.c.b16 %v647, %v646
        %v654 = vpack.c.b16 %v649, %v648
        %v655 = vpack.c.b16 %v651, %v650
        %vm660 = vcmask 31744
        %661 = vst.msk [vmem:[#allocation2] sm:$0xff] %vm660, %v652
        %662 = vst.msk [vmem:[#allocation2 + $0x8] sm:$0xff] %vm660, %v653
        %663 = vst.msk [vmem:[#allocation2 + $0x10] sm:$0xff] %vm660, %v654
        %664 = vst.msk [vmem:[#allocation2 + $0x18] sm:$0xff] %vm660, %v655
        %s665 = scalar_lea.vmem %s582, 72 [#allocation3]
        %v666 = vld [vmem:[%s665] sm:$0xf]
        %v667 = vld [vmem:[%s665 + $0x8] sm:$0xf]
        %v668 = vld [vmem:[%s665 + $0x10] sm:$0xf]
        %v669 = vld [vmem:[%s665 + $0x18] sm:$0xf]
        %v670 = vld [vmem:[%s665 + $0x20] sm:$0xf]
        %v671 = vld [vmem:[%s665 + $0x28] sm:$0xf]
        %v672 = vld [vmem:[%s665 + $0x30] sm:$0xf]
        %v673 = vld [vmem:[%s665 + $0x38] sm:$0xf]
        %v682 = vunpack.c.l.b16 %v666
        %v683 = vunpack.c.l.b16 %v667
        %v684 = vunpack.c.l.b16 %v668
        %v685 = vunpack.c.l.b16 %v669
        %v686 = vunpack.c.l.b16 %v670
        %v687 = vunpack.c.l.b16 %v671
        %v688 = vunpack.c.l.b16 %v672
        %v689 = vunpack.c.l.b16 %v673
        %v690 = vpack.c.b16 %v683, %v682
        %v691 = vpack.c.b16 %v685, %v684
        %v692 = vpack.c.b16 %v687, %v686
        %v693 = vpack.c.b16 %v689, %v688
        %694 = vrot.lane.b32.xlu0 %v690, 4
        %v695 = vpop.permute.xlu0 %694
        %696 = vrot.lane.b32.xlu0 %v691, 4
        %v697 = vpop.permute.xlu0 %696
        %698 = vrot.lane.b32.xlu0 %v692, 4
        %v699 = vpop.permute.xlu0 %698
        %700 = vrot.lane.b32.xlu0 %v693, 4
        %v701 = vpop.permute.xlu0 %700
        %vm706 = vcmask 64544
        %707 = vst.msk [vmem:[#allocation2] sm:$0xff] %vm706, %v695
        %708 = vst.msk [vmem:[#allocation2 + $0x8] sm:$0xff] %vm706, %v697
        %709 = vst.msk [vmem:[#allocation2 + $0x10] sm:$0xff] %vm706, %v699
        %710 = vst.msk [vmem:[#allocation2 + $0x18] sm:$0xff] %vm706, %v701
        %v711 = vld [vmem:[%s582] sm:$0xf]
        %v712 = vld [vmem:[%s582 + $0x4] sm:$0x1]
        %v713 = vld [vmem:[%s582 + $0x8] sm:$0xf]
        %v714 = vld [vmem:[%s582 + $0xc] sm:$0x1]
        %v715 = vld [vmem:[%s582 + $0x10] sm:$0xf]
        %v716 = vld [vmem:[%s582 + $0x14] sm:$0x1]
        %v717 = vld [vmem:[%s582 + $0x18] sm:$0xf]
        %v718 = vld [vmem:[%s582 + $0x1c] sm:$0x1]
        %v719 = vld [vmem:[%s582 + $0x20] sm:$0xf]
        %v720 = vld [vmem:[%s582 + $0x24] sm:$0x1]
        %v721 = vld [vmem:[%s582 + $0x28] sm:$0xf]
        %v722 = vld [vmem:[%s582 + $0x2c] sm:$0x1]
        %v723 = vld [vmem:[%s582 + $0x30] sm:$0xf]
        %v724 = vld [vmem:[%s582 + $0x34] sm:$0x1]
        %v725 = vld [vmem:[%s582 + $0x38] sm:$0xf]
        %v726 = vld [vmem:[%s582 + $0x3c] sm:$0x1]
        %vm727 = vsmask.f32 3328
        %vm728 = vsmask.f32 7440
        %vm729 = vmor %vm727, %vm728
        %v731 = vshrl.u32 %v711, 16
        %v733 = vrot.slane %v731, 4
        %v734 = vshll.u32 %v711, 16
        %v736 = vrot.slane %v734, 5
        %v737 = vor.u32 %v733, %v736
        %v738 = vrot.slane %v737, 4
        %v740 = vshll.u32 %v712, 16
        %v742 = vrot.slane %v740, 5
        %v743 = vsel %vm729, %v738, %v742
        %v745 = vshrl.u32 %v713, 16
        %v747 = vrot.slane %v745, 4
        %v748 = vshll.u32 %v713, 16
        %v750 = vrot.slane %v748, 5
        %v751 = vor.u32 %v747, %v750
        %v752 = vrot.slane %v751, 4
        %v754 = vshll.u32 %v714, 16
        %v756 = vrot.slane %v754, 5
        %v757 = vsel %vm729, %v752, %v756
        %v759 = vshrl.u32 %v715, 16
        %v761 = vrot.slane %v759, 4
        %v762 = vshll.u32 %v715, 16
        %v764 = vrot.slane %v762, 5
        %v765 = vor.u32 %v761, %v764
        %v766 = vrot.slane %v765, 4
        %v768 = vshll.u32 %v716, 16
        %v770 = vrot.slane %v768, 5
        %v771 = vsel %vm729, %v766, %v770
        %v773 = vshrl.u32 %v717, 16
        %v775 = vrot.slane %v773, 4
        %v776 = vshll.u32 %v717, 16
        %v778 = vrot.slane %v776, 5
        %v779 = vor.u32 %v775, %v778
        %v780 = vrot.slane %v779, 4
        %v782 = vshll.u32 %v718, 16
        %v784 = vrot.slane %v782, 5
        %v785 = vsel %vm729, %v780, %v784
        %v787 = vshrl.u32 %v719, 16
        %v789 = vrot.slane %v787, 4
        %v790 = vshll.u32 %v719, 16
        %v792 = vrot.slane %v790, 5
        %v793 = vor.u32 %v789, %v792
        %v794 = vrot.slane %v793, 4
        %v796 = vshll.u32 %v720, 16
        %v798 = vrot.slane %v796, 5
        %v799 = vsel %vm729, %v794, %v798
        %v801 = vshrl.u32 %v721, 16
        %v803 = vrot.slane %v801, 4
        %v804 = vshll.u32 %v721, 16
        %v806 = vrot.slane %v804, 5
        %v807 = vor.u32 %v803, %v806
        %v808 = vrot.slane %v807, 4
        %v810 = vshll.u32 %v722, 16
        %v812 = vrot.slane %v810, 5
        %v813 = vsel %vm729, %v808, %v812
        %v815 = vshrl.u32 %v723, 16
        %v817 = vrot.slane %v815, 4
        %v818 = vshll.u32 %v723, 16
        %v820 = vrot.slane %v818, 5
        %v821 = vor.u32 %v817, %v820
        %v822 = vrot.slane %v821, 4
        %v824 = vshll.u32 %v724, 16
        %v826 = vrot.slane %v824, 5
        %v827 = vsel %vm729, %v822, %v826
        %v829 = vshrl.u32 %v725, 16
        %v831 = vrot.slane %v829, 4
        %v832 = vshll.u32 %v725, 16
        %v834 = vrot.slane %v832, 5
        %v835 = vor.u32 %v831, %v834
        %v836 = vrot.slane %v835, 4
        %v838 = vshll.u32 %v726, 16
        %v840 = vrot.slane %v838, 5
        %v841 = vsel %vm729, %v836, %v840
        %v842 = vunpack.c.l.b16 %v743
        %v843 = vunpack.c.l.b16 %v757
        %v844 = vunpack.c.l.b16 %v771
        %v845 = vunpack.c.l.b16 %v785
        %v846 = vunpack.c.l.b16 %v799
        %v847 = vunpack.c.l.b16 %v813
        %v848 = vunpack.c.l.b16 %v827
        %v849 = vunpack.c.l.b16 %v841
        %v850 = vpack.c.b16 %v843, %v842
        %v851 = vpack.c.b16 %v845, %v844
        %v852 = vpack.c.b16 %v847, %v846
        %v853 = vpack.c.b16 %v849, %v848
        %854 = vrot.lane.b32.xlu0 %v850, 8
        %v855 = vpop.permute.xlu0 %854
        %856 = vrot.lane.b32.xlu0 %v851, 8
        %v857 = vpop.permute.xlu0 %856
        %858 = vrot.lane.b32.xlu0 %v852, 8
        %v859 = vpop.permute.xlu0 %858
        %860 = vrot.lane.b32.xlu0 %v853, 8
        %v861 = vpop.permute.xlu0 %860
        %vm866 = vcmask 97344
        %867 = vst.msk [vmem:[#allocation2] sm:$0xff] %vm866, %v855
        %868 = vst.msk [vmem:[#allocation2 + $0x8] sm:$0xff] %vm866, %v857
        %869 = vst.msk [vmem:[#allocation2 + $0x10] sm:$0xff] %vm866, %v859
        %870 = vst.msk [vmem:[#allocation2 + $0x18] sm:$0xff] %vm866, %v861
        %s871 = scalar_lea.vmem %s582, 144 [#allocation3]
        %v872 = vld [vmem:[%s871] sm:$0xf]
        %v873 = vld [vmem:[%s871 + $0x8] sm:$0xf]
        %v874 = vld [vmem:[%s871 + $0x10] sm:$0xf]
        %v875 = vld [vmem:[%s871 + $0x18] sm:$0xf]
        %v876 = vld [vmem:[%s871 + $0x20] sm:$0xf]
        %v877 = vld [vmem:[%s871 + $0x28] sm:$0xf]
        %v878 = vld [vmem:[%s871 + $0x30] sm:$0xf]
        %v879 = vld [vmem:[%s871 + $0x38] sm:$0xf]
        %v888 = vunpack.c.l.b16 %v872
        %v889 = vunpack.c.l.b16 %v873
        %v890 = vunpack.c.l.b16 %v874
        %v891 = vunpack.c.l.b16 %v875
        %v892 = vunpack.c.l.b16 %v876
        %v893 = vunpack.c.l.b16 %v877
        %v894 = vunpack.c.l.b16 %v878
        %v895 = vunpack.c.l.b16 %v879
        %v896 = vpack.c.b16 %v889, %v888
        %v897 = vpack.c.b16 %v891, %v890
        %v898 = vpack.c.b16 %v893, %v892
        %v899 = vpack.c.b16 %v895, %v894
        %900 = vrot.lane.b32.xlu0 %v896, 12
        %v901 = vpop.permute.xlu0 %900
        %902 = vrot.lane.b32.xlu0 %v897, 12
        %v903 = vpop.permute.xlu0 %902
        %904 = vrot.lane.b32.xlu0 %v898, 12
        %v905 = vpop.permute.xlu0 %904
        %906 = vrot.lane.b32.xlu0 %v899, 12
        %v907 = vpop.permute.xlu0 %906
        %vm912 = vcmask 130144
        %913 = vst.msk [vmem:[#allocation2] sm:$0xff] %vm912, %v901
        %914 = vst.msk [vmem:[#allocation2 + $0x8] sm:$0xff] %vm912, %v903
        %915 = vst.msk [vmem:[#allocation2 + $0x10] sm:$0xff] %vm912, %v905
        %916 = vst.msk [vmem:[#allocation2 + $0x18] sm:$0xff] %vm912, %v907
        %s917 = scalar_lea.vmem %s582, 216 [#allocation3]
        %v918 = vld [vmem:[%s917] sm:$0xf]
        %v919 = vld [vmem:[%s917 + $0x8] sm:$0xf]
        %v920 = vld [vmem:[%s917 + $0x10] sm:$0xf]
        %v921 = vld [vmem:[%s917 + $0x18] sm:$0xf]
        %v922 = vld [vmem:[%s917 + $0x20] sm:$0xf]
        %v923 = vld [vmem:[%s917 + $0x28] sm:$0xf]
        %v924 = vld [vmem:[%s917 + $0x30] sm:$0xf]
        %v925 = vld [vmem:[%s917 + $0x38] sm:$0xf]
        %v934 = vunpack.c.l.b16 %v918
        %v935 = vunpack.c.l.b16 %v919
        %v936 = vunpack.c.l.b16 %v920
        %v937 = vunpack.c.l.b16 %v921
        %v938 = vunpack.c.l.b16 %v922
        %v939 = vunpack.c.l.b16 %v923
        %v940 = vunpack.c.l.b16 %v924
        %v941 = vunpack.c.l.b16 %v925
        %v942 = vpack.c.b16 %v935, %v934
        %v943 = vpack.c.b16 %v937, %v936
        %v944 = vpack.c.b16 %v939, %v938
        %v945 = vpack.c.b16 %v941, %v940
        %946 = vrot.lane.b32.xlu0 %v942, 16
        %v947 = vpop.permute.xlu0 %946
        %948 = vrot.lane.b32.xlu0 %v943, 16
        %v949 = vpop.permute.xlu0 %948
        %950 = vrot.lane.b32.xlu0 %v944, 16
        %v951 = vpop.permute.xlu0 %950
        %952 = vrot.lane.b32.xlu0 %v945, 16
        %v953 = vpop.permute.xlu0 %952
        %vm958 = vcmask 162944
        %959 = vst.msk [vmem:[#allocation2] sm:$0xff] %vm958, %v947
        %960 = vst.msk [vmem:[#allocation2 + $0x8] sm:$0xff] %vm958, %v949
        %961 = vst.msk [vmem:[#allocation2 + $0x10] sm:$0xff] %vm958, %v951
        %962 = vst.msk [vmem:[#allocation2 + $0x18] sm:$0xff] %vm958, %v953
        %v963 = vld [vmem:[%s871] sm:$0xf]
        %v964 = vld [vmem:[%s871 + $0x4] sm:$0x1]
        %v965 = vld [vmem:[%s871 + $0x8] sm:$0xf]
        %v966 = vld [vmem:[%s871 + $0xc] sm:$0x1]
        %v967 = vld [vmem:[%s871 + $0x10] sm:$0xf]
        %v968 = vld [vmem:[%s871 + $0x14] sm:$0x1]
        %v969 = vld [vmem:[%s871 + $0x18] sm:$0xf]
        %v970 = vld [vmem:[%s871 + $0x1c] sm:$0x1]
        %v971 = vld [vmem:[%s871 + $0x20] sm:$0xf]
        %v972 = vld [vmem:[%s871 + $0x24] sm:$0x1]
        %v973 = vld [vmem:[%s871 + $0x28] sm:$0xf]
        %v974 = vld [vmem:[%s871 + $0x2c] sm:$0x1]
        %v975 = vld [vmem:[%s871 + $0x30] sm:$0xf]
        %v976 = vld [vmem:[%s871 + $0x34] sm:$0x1]
        %v977 = vld [vmem:[%s871 + $0x38] sm:$0xf]
        %v978 = vld [vmem:[%s871 + $0x3c] sm:$0x1]
        %v980 = vshrl.u32 %v963, 16
        %v982 = vrot.slane %v980, 4
        %v983 = vshll.u32 %v963, 16
        %v985 = vrot.slane %v983, 5
        %v986 = vor.u32 %v982, %v985
        %v987 = vrot.slane %v986, 4
        %v989 = vshll.u32 %v964, 16
        %v991 = vrot.slane %v989, 5
        %v992 = vsel %vm729, %v987, %v991
        %v994 = vshrl.u32 %v965, 16
        %v996 = vrot.slane %v994, 4
        %v997 = vshll.u32 %v965, 16
        %v999 = vrot.slane %v997, 5
        %v1000 = vor.u32 %v996, %v999
        %v1001 = vrot.slane %v1000, 4
        %v1003 = vshll.u32 %v966, 16
        %v1005 = vrot.slane %v1003, 5
        %v1006 = vsel %vm729, %v1001, %v1005
        %v1008 = vshrl.u32 %v967, 16
        %v1010 = vrot.slane %v1008, 4
        %v1011 = vshll.u32 %v967, 16
        %v1013 = vrot.slane %v1011, 5
        %v1014 = vor.u32 %v1010, %v1013
        %v1015 = vrot.slane %v1014, 4
        %v1017 = vshll.u32 %v968, 16
        %v1019 = vrot.slane %v1017, 5
        %v1020 = vsel %vm729, %v1015, %v1019
        %v1022 = vshrl.u32 %v969, 16
        %v1024 = vrot.slane %v1022, 4
        %v1025 = vshll.u32 %v969, 16
        %v1027 = vrot.slane %v1025, 5
        %v1028 = vor.u32 %v1024, %v1027
        %v1029 = vrot.slane %v1028, 4
        %v1031 = vshll.u32 %v970, 16
        %v1033 = vrot.slane %v1031, 5
        %v1034 = vsel %vm729, %v1029, %v1033
        %v1036 = vshrl.u32 %v971, 16
        %v1038 = vrot.slane %v1036, 4
        %v1039 = vshll.u32 %v971, 16
        %v1041 = vrot.slane %v1039, 5
        %v1042 = vor.u32 %v1038, %v1041
        %v1043 = vrot.slane %v1042, 4
        %v1045 = vshll.u32 %v972, 16
        %v1047 = vrot.slane %v1045, 5
        %v1048 = vsel %vm729, %v1043, %v1047
        %v1050 = vshrl.u32 %v973, 16
        %v1052 = vrot.slane %v1050, 4
        %v1053 = vshll.u32 %v973, 16
        %v1055 = vrot.slane %v1053, 5
        %v1056 = vor.u32 %v1052, %v1055
        %v1057 = vrot.slane %v1056, 4
        %v1059 = vshll.u32 %v974, 16
        %v1061 = vrot.slane %v1059, 5
        %v1062 = vsel %vm729, %v1057, %v1061
        %v1064 = vshrl.u32 %v975, 16
        %v1066 = vrot.slane %v1064, 4
        %v1067 = vshll.u32 %v975, 16
        %v1069 = vrot.slane %v1067, 5
        %v1070 = vor.u32 %v1066, %v1069
        %v1071 = vrot.slane %v1070, 4
        %v1073 = vshll.u32 %v976, 16
        %v1075 = vrot.slane %v1073, 5
        %v1076 = vsel %vm729, %v1071, %v1075
        %v1078 = vshrl.u32 %v977, 16
        %v1080 = vrot.slane %v1078, 4
        %v1081 = vshll.u32 %v977, 16
        %v1083 = vrot.slane %v1081, 5
        %v1084 = vor.u32 %v1080, %v1083
        %v1085 = vrot.slane %v1084, 4
        %v1087 = vshll.u32 %v978, 16
        %v1089 = vrot.slane %v1087, 5
        %v1090 = vsel %vm729, %v1085, %v1089
        %v1091 = vunpack.c.l.b16 %v992
        %v1092 = vunpack.c.l.b16 %v1006
        %v1093 = vunpack.c.l.b16 %v1020
        %v1094 = vunpack.c.l.b16 %v1034
        %v1095 = vunpack.c.l.b16 %v1048
        %v1096 = vunpack.c.l.b16 %v1062
        %v1097 = vunpack.c.l.b16 %v1076
        %v1098 = vunpack.c.l.b16 %v1090
        %v1099 = vpack.c.b16 %v1092, %v1091
        %v1100 = vpack.c.b16 %v1094, %v1093
        %v1101 = vpack.c.b16 %v1096, %v1095
        %v1102 = vpack.c.b16 %v1098, %v1097
        %1103 = vrot.lane.b32.xlu0 %v1099, 20
        %v1104 = vpop.permute.xlu0 %1103
        %1105 = vrot.lane.b32.xlu0 %v1100, 20
        %v1106 = vpop.permute.xlu0 %1105
        %1107 = vrot.lane.b32.xlu0 %v1101, 20
        %v1108 = vpop.permute.xlu0 %1107
        %1109 = vrot.lane.b32.xlu0 %v1102, 20
        %v1110 = vpop.permute.xlu0 %1109
        %vm1115 = vcmask 195744
        %1116 = vst.msk [vmem:[#allocation2] sm:$0xff] %vm1115, %v1104
        %1117 = vst.msk [vmem:[#allocation2 + $0x8] sm:$0xff] %vm1115, %v1106
        %1118 = vst.msk [vmem:[#allocation2 + $0x10] sm:$0xff] %vm1115, %v1108
        %1119 = vst.msk [vmem:[#allocation2 + $0x18] sm:$0xff] %vm1115, %v1110
        %s1120 = scalar_lea.vmem %s582, 8 [#allocation3]
        %v1121 = vld [vmem:[%s1120] sm:$0xf]
        %v1122 = vld [vmem:[%s1120 + $0x8] sm:$0xf]
        %v1123 = vld [vmem:[%s1120 + $0x10] sm:$0xf]
        %v1124 = vld [vmem:[%s1120 + $0x18] sm:$0xf]
        %v1125 = vld [vmem:[%s1120 + $0x20] sm:$0xf]
        %v1126 = vld [vmem:[%s1120 + $0x28] sm:$0xf]
        %v1127 = vld [vmem:[%s1120 + $0x30] sm:$0xf]
        %v1128 = vld [vmem:[%s1120 + $0x38] sm:$0xf]
        %v1137 = vunpack.c.l.b16 %v1121
        %v1138 = vunpack.c.l.b16 %v1122
        %v1139 = vunpack.c.l.b16 %v1123
        %v1140 = vunpack.c.l.b16 %v1124
        %v1141 = vunpack.c.l.b16 %v1125
        %v1142 = vunpack.c.l.b16 %v1126
        %v1143 = vunpack.c.l.b16 %v1127
        %v1144 = vunpack.c.l.b16 %v1128
        %v1145 = vpack.c.b16 %v1138, %v1137
        %v1146 = vpack.c.b16 %v1140, %v1139
        %v1147 = vpack.c.b16 %v1142, %v1141
        %v1148 = vpack.c.b16 %v1144, %v1143
        %1149 = vrot.lane.b32.xlu0 %v1145, 24
        %v1150 = vpop.permute.xlu0 %1149
        %1151 = vrot.lane.b32.xlu0 %v1146, 24
        %v1152 = vpop.permute.xlu0 %1151
        %1153 = vrot.lane.b32.xlu0 %v1147, 24
        %v1154 = vpop.permute.xlu0 %1153
        %1155 = vrot.lane.b32.xlu0 %v1148, 24
        %v1156 = vpop.permute.xlu0 %1155
        %vm1161 = vcmask 228544
        %1162 = vst.msk [vmem:[#allocation2] sm:$0xff] %vm1161, %v1150
        %1163 = vst.msk [vmem:[#allocation2 + $0x8] sm:$0xff] %vm1161, %v1152
        %1164 = vst.msk [vmem:[#allocation2 + $0x10] sm:$0xff] %vm1161, %v1154
        %1165 = vst.msk [vmem:[#allocation2 + $0x18] sm:$0xff] %vm1161, %v1156
        %s1166 = scalar_lea.vmem %s582, 80 [#allocation3]
        %v1167 = vld [vmem:[%s1166] sm:$0xf]
        %v1168 = vld [vmem:[%s1166 + $0x8] sm:$0xf]
        %v1169 = vld [vmem:[%s1166 + $0x10] sm:$0xf]
        %v1170 = vld [vmem:[%s1166 + $0x18] sm:$0xf]
        %v1171 = vld [vmem:[%s1166 + $0x20] sm:$0xf]
        %v1172 = vld [vmem:[%s1166 + $0x28] sm:$0xf]
        %v1173 = vld [vmem:[%s1166 + $0x30] sm:$0xf]
        %v1174 = vld [vmem:[%s1166 + $0x38] sm:$0xf]
        %v1183 = vunpack.c.l.b16 %v1167
        %v1184 = vunpack.c.l.b16 %v1168
        %v1185 = vunpack.c.l.b16 %v1169
        %v1186 = vunpack.c.l.b16 %v1170
        %v1187 = vunpack.c.l.b16 %v1171
        %v1188 = vunpack.c.l.b16 %v1172
        %v1189 = vunpack.c.l.b16 %v1173
        %v1190 = vunpack.c.l.b16 %v1174
        %v1191 = vpack.c.b16 %v1184, %v1183
        %v1192 = vpack.c.b16 %v1186, %v1185
        %v1193 = vpack.c.b16 %v1188, %v1187
        %v1194 = vpack.c.b16 %v1190, %v1189
        %1195 = vrot.lane.b32.xlu0 %v1191, 28
        %v1196 = vpop.permute.xlu0 %1195
        %1197 = vrot.lane.b32.xlu0 %v1192, 28
        %v1198 = vpop.permute.xlu0 %1197
        %1199 = vrot.lane.b32.xlu0 %v1193, 28
        %v1200 = vpop.permute.xlu0 %1199
        %1201 = vrot.lane.b32.xlu0 %v1194, 28
        %v1202 = vpop.permute.xlu0 %1201
        %vm1207 = vcmask 261344
        %1208 = vst.msk [vmem:[#allocation2] sm:$0xff] %vm1207, %v1196
        %1209 = vst.msk [vmem:[#allocation2 + $0x8] sm:$0xff] %vm1207, %v1198
        %1210 = vst.msk [vmem:[#allocation2 + $0x10] sm:$0xff] %vm1207, %v1200
        %1211 = vst.msk [vmem:[#allocation2 + $0x18] sm:$0xff] %vm1207, %v1202
        %v1212 = vld [vmem:[%s1120] sm:$0xf]
        %v1213 = vld [vmem:[%s1120 + $0x4] sm:$0x1]
        %v1214 = vld [vmem:[%s1120 + $0x8] sm:$0xf]
        %v1215 = vld [vmem:[%s1120 + $0xc] sm:$0x1]
        %v1216 = vld [vmem:[%s1120 + $0x10] sm:$0xf]
        %v1217 = vld [vmem:[%s1120 + $0x14] sm:$0x1]
        %v1218 = vld [vmem:[%s1120 + $0x18] sm:$0xf]
        %v1219 = vld [vmem:[%s1120 + $0x1c] sm:$0x1]
        %v1220 = vld [vmem:[%s1120 + $0x20] sm:$0xf]
        %v1221 = vld [vmem:[%s1120 + $0x24] sm:$0x1]
        %v1222 = vld [vmem:[%s1120 + $0x28] sm:$0xf]
        %v1223 = vld [vmem:[%s1120 + $0x2c] sm:$0x1]
        %v1224 = vld [vmem:[%s1120 + $0x30] sm:$0xf]
        %v1225 = vld [vmem:[%s1120 + $0x34] sm:$0x1]
        %v1226 = vld [vmem:[%s1120 + $0x38] sm:$0xf]
        %v1227 = vld [vmem:[%s1120 + $0x3c] sm:$0x1]
        %v1229 = vshrl.u32 %v1212, 16
        %v1231 = vrot.slane %v1229, 4
        %v1232 = vshll.u32 %v1212, 16
        %v1234 = vrot.slane %v1232, 5
        %v1235 = vor.u32 %v1231, %v1234
        %v1236 = vrot.slane %v1235, 4
        %v1238 = vshll.u32 %v1213, 16
        %v1240 = vrot.slane %v1238, 5
        %v1241 = vsel %vm729, %v1236, %v1240
        %v1243 = vshrl.u32 %v1214, 16
        %v1245 = vrot.slane %v1243, 4
        %v1246 = vshll.u32 %v1214, 16
        %v1248 = vrot.slane %v1246, 5
        %v1249 = vor.u32 %v1245, %v1248
        %v1250 = vrot.slane %v1249, 4
        %v1252 = vshll.u32 %v1215, 16
        %v1254 = vrot.slane %v1252, 5
        %v1255 = vsel %vm729, %v1250, %v1254
        %v1257 = vshrl.u32 %v1216, 16
        %v1259 = vrot.slane %v1257, 4
        %v1260 = vshll.u32 %v1216, 16
        %v1262 = vrot.slane %v1260, 5
        %v1263 = vor.u32 %v1259, %v1262
        %v1264 = vrot.slane %v1263, 4
        %v1266 = vshll.u32 %v1217, 16
        %v1268 = vrot.slane %v1266, 5
        %v1269 = vsel %vm729, %v1264, %v1268
        %v1271 = vshrl.u32 %v1218, 16
        %v1273 = vrot.slane %v1271, 4
        %v1274 = vshll.u32 %v1218, 16
        %v1276 = vrot.slane %v1274, 5
        %v1277 = vor.u32 %v1273, %v1276
        %v1278 = vrot.slane %v1277, 4
        %v1280 = vshll.u32 %v1219, 16
        %v1282 = vrot.slane %v1280, 5
        %v1283 = vsel %vm729, %v1278, %v1282
        %v1285 = vshrl.u32 %v1220, 16
        %v1287 = vrot.slane %v1285, 4
        %v1288 = vshll.u32 %v1220, 16
        %v1290 = vrot.slane %v1288, 5
        %v1291 = vor.u32 %v1287, %v1290
        %v1292 = vrot.slane %v1291, 4
        %v1294 = vshll.u32 %v1221, 16
        %v1296 = vrot.slane %v1294, 5
        %v1297 = vsel %vm729, %v1292, %v1296
        %v1299 = vshrl.u32 %v1222, 16
        %v1301 = vrot.slane %v1299, 4
        %v1302 = vshll.u32 %v1222, 16
        %v1304 = vrot.slane %v1302, 5
        %v1305 = vor.u32 %v1301, %v1304
        %v1306 = vrot.slane %v1305, 4
        %v1308 = vshll.u32 %v1223, 16
        %v1310 = vrot.slane %v1308, 5
        %v1311 = vsel %vm729, %v1306, %v1310
        %v1313 = vshrl.u32 %v1224, 16
        %v1315 = vrot.slane %v1313, 4
        %v1316 = vshll.u32 %v1224, 16
        %v1318 = vrot.slane %v1316, 5
        %v1319 = vor.u32 %v1315, %v1318
        %v1320 = vrot.slane %v1319, 4
        %v1322 = vshll.u32 %v1225, 16
        %v1324 = vrot.slane %v1322, 5
        %v1325 = vsel %vm729, %v1320, %v1324
        %v1327 = vshrl.u32 %v1226, 16
        %v1329 = vrot.slane %v1327, 4
        %v1330 = vshll.u32 %v1226, 16
        %v1332 = vrot.slane %v1330, 5
        %v1333 = vor.u32 %v1329, %v1332
        %v1334 = vrot.slane %v1333, 4
        %v1336 = vshll.u32 %v1227, 16
        %v1338 = vrot.slane %v1336, 5
        %v1339 = vsel %vm729, %v1334, %v1338
        %v1340 = vunpack.c.l.b16 %v1241
        %v1341 = vunpack.c.l.b16 %v1255
        %v1342 = vunpack.c.l.b16 %v1269
        %v1343 = vunpack.c.l.b16 %v1283
        %v1344 = vunpack.c.l.b16 %v1297
        %v1345 = vunpack.c.l.b16 %v1311
        %v1346 = vunpack.c.l.b16 %v1325
        %v1347 = vunpack.c.l.b16 %v1339
        %v1348 = vpack.c.b16 %v1341, %v1340
        %v1349 = vpack.c.b16 %v1343, %v1342
        %v1350 = vpack.c.b16 %v1345, %v1344
        %v1351 = vpack.c.b16 %v1347, %v1346
        %1352 = vrot.lane.b32.xlu0 %v1348, 32
        %v1353 = vpop.permute.xlu0 %1352
        %1354 = vrot.lane.b32.xlu0 %v1349, 32
        %v1355 = vpop.permute.xlu0 %1354
        %1356 = vrot.lane.b32.xlu0 %v1350, 32
        %v1357 = vpop.permute.xlu0 %1356
        %1358 = vrot.lane.b32.xlu0 %v1351, 32
        %v1359 = vpop.permute.xlu0 %1358
        %vm1364 = vcmask 294144
        %1365 = vst.msk [vmem:[#allocation2] sm:$0xff] %vm1364, %v1353
        %1366 = vst.msk [vmem:[#allocation2 + $0x8] sm:$0xff] %vm1364, %v1355
        %1367 = vst.msk [vmem:[#allocation2 + $0x10] sm:$0xff] %vm1364, %v1357
        %1368 = vst.msk [vmem:[#allocation2 + $0x18] sm:$0xff] %vm1364, %v1359
        %v1369 = vld [vmem:[#allocation2] sm:$0xff]
        %v1370 = vld [vmem:[#allocation2 + $0x8] sm:$0xff]
        %v1371 = vld [vmem:[#allocation2 + $0x10] sm:$0xff]
        %v1372 = vld [vmem:[#allocation2 + $0x18] sm:$0xff]
        %v1373 = vld [vmem:[%s1] sm:$0xf]
        %v1374 = vld [vmem:[%s1 + $0x4] sm:$0xf]
        %v1375 = vld [vmem:[%s1 + $0x8] sm:$0xf]
        %v1376 = vld [vmem:[%s1 + $0xc] sm:$0xf]
        %v1377 = vld [vmem:[%s1 + $0x10] sm:$0x3]
        %v1383 = vunpack.c.l.b16 %v1373
        %v1384 = vunpack.c.l.b16 %v1374
        %v1385 = vunpack.c.l.b16 %v1375
        %v1386 = vunpack.c.l.b16 %v1376
        %v1387 = vunpack.c.l.b16 %v1377
        %v1388 = vpack.c.b16 %v1384, %v1383
        %v1389 = vpack.c.b16 %v1386, %v1385
        %v1390 = vpack.c.b16 %v1387, %v1387
        %vm1393 = vcmask 293888
        %v1395 = vsel %vm1393, %v1369, 0
        %v1398 = vsel %vm1393, %v1370, 0
        %v1401 = vsel %vm1393, %v1371, 0
        %v1404 = vsel %vm1393, %v1372, 0
        %vm1406 = vcmask 1041408
        %v1408 = vsel %vm1406, %v1390, 0
        %1410 = vmatprep.subr.bf16.mxu0 0
        %1411 = vmatpush1.bf16.msra.mxu0 %v1388
        %1412 = vmatprep.subr.bf16.mxu0 0
        %1413 = vmatpush1.bf16.msra.mxu0 %v1389
        %1414 = vmatprep.subr.bf16.mxu0 0
        %1415 = vmatpush1.bf16.msra.mxu0 %v1408
        %1416 = vmatprep.subr.bf16.mxu0 0
        %1417 = vmatpush1.bf16.msra.mxu0 0
        %1418 = vmatprep.subr.bf16.mxu0 0
        %1419 = vmatpush1.bf16.msra.mxu0 0
        %1420 = vmatprep.subr.bf16.mxu0 0
        %1421 = vmatpush1.bf16.msra.mxu0 0
        %1422 = vmatprep.subr.bf16.mxu0 0
        %1423 = vmatpush1.bf16.msra.mxu0 0
        %1424 = vmatprep.subr.bf16.mxu0 0
        %1425 = vmatpush1.bf16.msra.mxu0 0
        %1426 = vmatprep.subr.bf16.mxu0 0
        %1427 = vmatpush1.bf16.msra.mxu0 0
        %1428 = vmatprep.subr.bf16.mxu0 0
        %1429 = vmatpush1.bf16.msra.mxu0 0
        %1430 = vmatprep.subr.bf16.mxu0 0
        %1431 = vmatpush1.bf16.msra.mxu0 0
        %1432 = vmatprep.subr.bf16.mxu0 0
        %1433 = vmatpush1.bf16.msra.mxu0 0
        %1434 = vmatprep.subr.bf16.mxu0 0
        %1435 = vmatpush1.bf16.msra.mxu0 0
        %1436 = vmatprep.subr.bf16.mxu0 0
        %1437 = vmatpush1.bf16.msra.mxu0 0
        %1438 = vmatprep.subr.bf16.mxu0 0
        %1439 = vmatpush1.bf16.msra.mxu0 0
        %1440 = vmatprep.subr.bf16.mxu0 0
        %1441 = vmatpush1.bf16.msra.mxu0 0
        %1442 = vmatprep.mubr.bf16.mxu0 0
        %1443 = vmatmul.mubr.bf16.gmra.mrb[0].mxu0 %v1395
        %v1444 = vpop.f32.mrb[0].mxu0
        %v1445 = vadd.f32 0.0, %v1444
        %v1446 = vpop.f32.mrb[0].mxu0
        %v1447 = vpop.f32.mrb[0].mxu0
        %v1448 = vadd.f32 0.0, %v1447
        %v1449 = vpop.f32.mrb[0].mxu0
        %1450 = vmatprep.mubr.bf16.mxu0 0
        %1451 = vmatmul.mubr.bf16.gmra.mrb[0].mxu0 %v1398
        %v1452 = vpop.f32.mrb[0].mxu0
        %v1453 = vadd.f32 0.0, %v1452
        %v1454 = vpop.f32.mrb[0].mxu0
        %v1455 = vpop.f32.mrb[0].mxu0
        %v1456 = vadd.f32 0.0, %v1455
        %v1457 = vpop.f32.mrb[0].mxu0
        %1458 = vmatprep.mubr.bf16.mxu0 0
        %1459 = vmatmul.mubr.bf16.gmra.mrb[0].mxu0 %v1401
        %v1460 = vpop.f32.mrb[0].mxu0
        %v1461 = vadd.f32 0.0, %v1460
        %v1462 = vpop.f32.mrb[0].mxu0
        %v1463 = vpop.f32.mrb[0].mxu0
        %v1464 = vadd.f32 0.0, %v1463
        %v1465 = vpop.f32.mrb[0].mxu0
        %1466 = vmatprep.mubr.bf16.mxu0 0
        %1467 = vmatmul.mubr.bf16.gmra.mrb[0].mxu0 %v1404
        %v1468 = vpop.f32.mrb[0].mxu0
        %v1469 = vadd.f32 0.0, %v1468
        %v1470 = vpop.f32.mrb[0].mxu0
        %v1471 = vpop.f32.mrb[0].mxu0
        %v1472 = vadd.f32 0.0, %v1471
        %v1473 = vpop.f32.mrb[0].mxu0
        %1474 = vdwg.mxu0
        %v1475 = vpack.c.bf16 %v1448, %v1445
        %v1476 = vpack.c.bf16 %v1456, %v1453
        %v1477 = vpack.c.bf16 %v1464, %v1461
        %v1478 = vpack.c.bf16 %v1472, %v1469
        %v1483 = vunpack.c.l.b16 %v1475
        %v1484 = vunpack.c.h.b16 %v1475
        %v1485 = vunpack.c.l.b16 %v1476
        %v1486 = vunpack.c.h.b16 %v1476
        %v1487 = vunpack.c.l.b16 %v1477
        %v1488 = vunpack.c.h.b16 %v1477
        %v1489 = vunpack.c.l.b16 %v1478
        %v1490 = vunpack.c.h.b16 %v1478
        %v1491 = vpack.c.b16 %v1483, %v1483
        %v1492 = vpack.c.b16 %v1484, %v1484
        %v1493 = vpack.c.b16 %v1485, %v1485
        %v1494 = vpack.c.b16 %v1486, %v1486
        %v1495 = vpack.c.b16 %v1487, %v1487
        %v1496 = vpack.c.b16 %v1488, %v1488
        %v1497 = vpack.c.b16 %v1489, %v1489
        %v1498 = vpack.c.b16 %v1490, %v1490
        %1507 = vst [vmem:[%s609] sm:$0xf] %v1491
        %1508 = vst [vmem:[%s609 + $0x4] sm:$0xf] %v1492
        %1509 = vst [vmem:[%s609 + $0x8] sm:$0xf] %v1493
        %1510 = vst [vmem:[%s609 + $0xc] sm:$0xf] %v1494
        %1511 = vst [vmem:[%s609 + $0x10] sm:$0xf] %v1495
        %1512 = vst [vmem:[%s609 + $0x14] sm:$0xf] %v1496
        %1513 = vst [vmem:[%s609 + $0x18] sm:$0xf] %v1497
        %1514 = vst [vmem:[%s609 + $0x1c] sm:$0xf] %v1498
        %v1515 = vadd.f32 %v1445, %v1448
        %v1516 = vadd.f32 %v1515, %v1453
        %v1517 = vadd.f32 %v1516, %v1456
        %v1518 = vadd.f32 %v1517, %v1461
        %v1519 = vadd.f32 %v1518, %v1464
        %v1520 = vadd.f32 %v1519, %v1469
        %v1521 = vadd.f32 %v1520, %v1472
        %v1522 = vrot.slane %v1521, 4
        %v1523 = vadd.f32 %v1521, %v1522
        %v1524 = vrot.slane %v1523, 2
        %v1525 = vadd.f32 %v1523, %v1524
        %v1526 = vrot.slane %v1525, 1
        %v1527 = vadd.f32 %v1525, %v1526
        %v1528 = vmul.f32 %v1445, %v1445
        %v1529 = vmul.f32 %v1448, %v1448
        %v1530 = vmul.f32 %v1453, %v1453
        %v1531 = vmul.f32 %v1456, %v1456
        %v1532 = vmul.f32 %v1461, %v1461
        %v1533 = vmul.f32 %v1464, %v1464
        %v1534 = vmul.f32 %v1469, %v1469
        %v1535 = vmul.f32 %v1472, %v1472
        %v1536 = vadd.f32 %v1528, %v1529
        %v1537 = vadd.f32 %v1536, %v1530
        %v1538 = vadd.f32 %v1537, %v1531
        %v1539 = vadd.f32 %v1538, %v1532
        %v1540 = vadd.f32 %v1539, %v1533
        %v1541 = vadd.f32 %v1540, %v1534
        %v1542 = vadd.f32 %v1541, %v1535
        %v1543 = vrot.slane %v1542, 4
        %v1544 = vadd.f32 %v1542, %v1543
        %v1545 = vrot.slane %v1544, 2
        %v1546 = vadd.f32 %v1544, %v1545
        %v1547 = vrot.slane %v1546, 1
        %v1548 = vadd.f32 %v1546, %v1547
        %vm1549 = vcmask 1040384
        %v1550 = vsel %vm1549, %v1527, %v1548
        // Predicated region
        $region78: #{tpu_custom_call.1} parent=72 // pred_check
          %p1551 = pneg %p627
        $region79: #{tpu_custom_call.1} parent=72 // pred_check_branch
          %1553 = sbr.rel (%p1551) target = $region81
        $region80: #{tpu_custom_call.1} parent=72 // pred_region
          %1554 = vst [vmem:[#allocation6] sm:$0x3] 0.0
        $region81: #{tpu_custom_call.1} parent=72 // pred_fallthru
          _
        %v1555 = vld [vmem:[#allocation6] sm:$0x3]
        %v1556 = vadd.f32 %v1555, %v1550
        %1557 = vst [vmem:[#allocation6] sm:$0x3] %v1556
        %v1558 = vld [vmem:[%s625] sm:$0xf]
        %v1559 = vld [vmem:[%s625 + $0x4] sm:$0xf]
        %v1560 = vld [vmem:[%s625 + $0x8] sm:$0xf]
        %v1561 = vld [vmem:[%s625 + $0xc] sm:$0xf]
        %v1562 = vld [vmem:[%s625 + $0x10] sm:$0xf]
        %v1563 = vld [vmem:[%s625 + $0x14] sm:$0xf]
        %v1564 = vld [vmem:[%s625 + $0x18] sm:$0xf]
        %v1565 = vld [vmem:[%s625 + $0x1c] sm:$0xf]
        %v1566 = vld [vmem:[%s3] sm:$0x3]
        %v1575 = vunpack.c.l.b16 %v1558
        %v1576 = vunpack.c.l.b16 %v1559
        %v1577 = vunpack.c.l.b16 %v1560
        %v1578 = vunpack.c.l.b16 %v1561
        %v1579 = vunpack.c.l.b16 %v1562
        %v1580 = vunpack.c.l.b16 %v1563
        %v1581 = vunpack.c.l.b16 %v1564
        %v1582 = vunpack.c.l.b16 %v1565
        %v1583 = vpack.c.b16 %v1576, %v1575
        %v1584 = vpack.c.b16 %v1578, %v1577
        %v1585 = vpack.c.b16 %v1580, %v1579
        %v1586 = vpack.c.b16 %v1582, %v1581
        %v1588 = vsel %vm660, %v1583, 0
        %v1591 = vsel %vm660, %v1584, 0
        %v1594 = vsel %vm660, %v1585, 0
        %v1597 = vsel %vm660, %v1586, 0
        %v1600 = vsel %vm1406, %v1566, 0
        %1602 = vmatprep.subr.bf16.mxu0 0
        %1603 = vmatpush1.bf16.msra.mxu0 %v1600
        %1604 = vmatprep.subr.bf16.mxu0 0
        %1605 = vmatpush1.bf16.msra.mxu0 0
        %1606 = vmatprep.subr.bf16.mxu0 0
        %1607 = vmatpush1.bf16.msra.mxu0 0
        %1608 = vmatprep.subr.bf16.mxu0 0
        %1609 = vmatpush1.bf16.msra.mxu0 0
        %1610 = vmatprep.subr.bf16.mxu0 0
        %1611 = vmatpush1.bf16.msra.mxu0 0
        %1612 = vmatprep.subr.bf16.mxu0 0
        %1613 = vmatpush1.bf16.msra.mxu0 0
        %1614 = vmatprep.subr.bf16.mxu0 0
        %1615 = vmatpush1.bf16.msra.mxu0 0
        %1616 = vmatprep.subr.bf16.mxu0 0
        %1617 = vmatpush1.bf16.msra.mxu0 0
        %1618 = vmatprep.subr.bf16.mxu0 0
        %1619 = vmatpush1.bf16.msra.mxu0 0
        %1620 = vmatprep.subr.bf16.mxu0 0
        %1621 = vmatpush1.bf16.msra.mxu0 0
        %1622 = vmatprep.subr.bf16.mxu0 0
        %1623 = vmatpush1.bf16.msra.mxu0 0
        %1624 = vmatprep.subr.bf16.mxu0 0
        %1625 = vmatpush1.bf16.msra.mxu0 0
        %1626 = vmatprep.subr.bf16.mxu0 0
        %1627 = vmatpush1.bf16.msra.mxu0 0
        %1628 = vmatprep.subr.bf16.mxu0 0
        %1629 = vmatpush1.bf16.msra.mxu0 0
        %1630 = vmatprep.subr.bf16.mxu0 0
        %1631 = vmatpush1.bf16.msra.mxu0 0
        %1632 = vmatprep.subr.bf16.mxu0 0
        %1633 = vmatpush1.bf16.msra.mxu0 0
        %1634 = vmatprep.mubr.bf16.mxu0 0
        %1635 = vmatmul.mubr.bf16.gmra.mrb[0].mxu0 %v1588
        %v1636 = vpop.f32.mrb[0].mxu0
        %v1637 = vadd.f32 0.0, %v1636
        %v1638 = vpop.f32.mrb[0].mxu0
        %v1639 = vpop.f32.mrb[0].mxu0
        %v1640 = vadd.f32 0.0, %v1639
        %v1641 = vpop.f32.mrb[0].mxu0
        %1642 = vmatprep.mubr.bf16.mxu0 0
        %1643 = vmatmul.mubr.bf16.gmra.mrb[0].mxu0 %v1591
        %v1644 = vpop.f32.mrb[0].mxu0
        %v1645 = vadd.f32 0.0, %v1644
        %v1646 = vpop.f32.mrb[0].mxu0
        %v1647 = vpop.f32.mrb[0].mxu0
        %v1648 = vadd.f32 0.0, %v1647
        %v1649 = vpop.f32.mrb[0].mxu0
        %1650 = vmatprep.mubr.bf16.mxu0 0
        %1651 = vmatmul.mubr.bf16.gmra.mrb[0].mxu0 %v1594
        %v1652 = vpop.f32.mrb[0].mxu0
        %v1653 = vadd.f32 0.0, %v1652
        %v1654 = vpop.f32.mrb[0].mxu0
        %v1655 = vpop.f32.mrb[0].mxu0
        %v1656 = vadd.f32 0.0, %v1655
        %v1657 = vpop.f32.mrb[0].mxu0
        %1658 = vmatprep.mubr.bf16.mxu0 0
        %1659 = vmatmul.mubr.bf16.gmra.mrb[0].mxu0 %v1597
        %v1660 = vpop.f32.mrb[0].mxu0
        %v1661 = vadd.f32 0.0, %v1660
        %v1662 = vpop.f32.mrb[0].mxu0
        %v1663 = vpop.f32.mrb[0].mxu0
        %v1664 = vadd.f32 0.0, %v1663
        %v1665 = vpop.f32.mrb[0].mxu0
        %1666 = vdwg.mxu0
        %1667 = vst [vmem:[%s618] sm:$0xff] %v1637
        %1668 = vst [vmem:[%s618 + $0x8] sm:$0xff] %v1640
        %1669 = vst [vmem:[%s618 + $0x10] sm:$0xff] %v1645
        %1670 = vst [vmem:[%s618 + $0x18] sm:$0xff] %v1648
        %1671 = vst [vmem:[%s618 + $0x20] sm:$0xff] %v1653
        %1672 = vst [vmem:[%s618 + $0x28] sm:$0xff] %v1656
        %1673 = vst [vmem:[%s618 + $0x30] sm:$0xff] %v1661
        %1674 = vst [vmem:[%s618 + $0x38] sm:$0xff] %v1664
        %v1675 = vadd.f32 %v1637, %v1640
        %v1676 = vadd.f32 %v1675, %v1645
        %v1677 = vadd.f32 %v1676, %v1648
        %v1678 = vadd.f32 %v1677, %v1653
        %v1679 = vadd.f32 %v1678, %v1656
        %v1680 = vadd.f32 %v1679, %v1661
        %v1681 = vadd.f32 %v1680, %v1664
        %v1682 = vrot.slane %v1681, 4
        %v1683 = vadd.f32 %v1681, %v1682
        %v1684 = vrot.slane %v1683, 2
        %v1685 = vadd.f32 %v1683, %v1684
        %v1686 = vrot.slane %v1685, 1
        %v1687 = vadd.f32 %v1685, %v1686
        %v1688 = vmul.f32 %v1637, %v1637
        %v1689 = vmul.f32 %v1640, %v1640
        %v1690 = vmul.f32 %v1645, %v1645
        %v1691 = vmul.f32 %v1648, %v1648
        %v1692 = vmul.f32 %v1653, %v1653
        %v1693 = vmul.f32 %v1656, %v1656
        %v1694 = vmul.f32 %v1661, %v1661
        %v1695 = vmul.f32 %v1664, %v1664
        %v1696 = vadd.f32 %v1688, %v1689
        %v1697 = vadd.f32 %v1696, %v1690
        %v1698 = vadd.f32 %v1697, %v1691
        %v1699 = vadd.f32 %v1698, %v1692
        %v1700 = vadd.f32 %v1699, %v1693
        %v1701 = vadd.f32 %v1700, %v1694
        %v1702 = vadd.f32 %v1701, %v1695
        %v1703 = vrot.slane %v1702, 4
        %v1704 = vadd.f32 %v1702, %v1703
        %v1705 = vrot.slane %v1704, 2
        %v1706 = vadd.f32 %v1704, %v1705
        %v1707 = vrot.slane %v1706, 1
        %v1708 = vadd.f32 %v1706, %v1707
        %v1709 = vsel %vm1549, %v1687, %v1708
        // Predicated region
        $region82: #{tpu_custom_call.1} parent=72 // pred_check
          %p1710 = pneg %p627
        $region83: #{tpu_custom_call.1} parent=72 // pred_check_branch
          %1712 = sbr.rel (%p1710) target = $region85
        $region84: #{tpu_custom_call.1} parent=72 // pred_region
          %1713 = vst [vmem:[#allocation9] sm:$0x3] 0.0
        $region85: #{tpu_custom_call.1} parent=72 // pred_fallthru
          _
        %v1714 = vld [vmem:[#allocation9] sm:$0x3]
        %v1715 = vadd.f32 %v1714, %v1709
        %1716 = vst [vmem:[#allocation9] sm:$0x3] %v1715
        %s1717 = sand.u32 %s23, 1
        %s1718 = scalar_lea.sflag [#allocation5], %s1717
        %s1719 = sand.u32 %s125, 1
        %s1720 = smul.addr %s1719, 32
        %s1721 = scalar_lea.vmem [#allocation4], %s1720
        %s1722 = sand.u32 %s23, 1
        %s1723 = scalar_lea.sflag [#allocation5], %s1722
        %s1724 = sand.u32 %s172, 1
        %s1725 = smul.addr %s1724, 64
        %s1726 = scalar_lea.vmem [#allocation8], %s1725
        // Predicated region
        $region86: #{tpu_custom_call.1} parent=72 // pred_check
          %p1727 = pneg %p135
        $region87: #{tpu_custom_call.1} parent=72 // pred_check_branch
          %1729 = sbr.rel (%p1727) target = $region89
        $region88: #{tpu_custom_call.1} parent=72 // pred_region
          %s1731 = ssub.s32 512, 512
          %1732 = vsyncadd %s1718, %s1731
          %s1733 = smul.addr %s23, 8
          %s1734 = smul.addr %s1733, 64
          %s1735 = scalar_lea.hbm %s4, %s1734
          %s1736 = sshll.u32 %s1721, 4
          %s1737 = int_to_ptr.vmem [resolvable:$true] %s1736
          %1742 = dma.vmem_to_hbm [thread:$0]  %s1737, 512, %s1735, %s1718, 64, 64, 4
        $region89: #{tpu_custom_call.1} parent=72 // pred_fallthru
          _
        // Predicated region
        $region90: #{tpu_custom_call.1} parent=72 // pred_check
          %p1743 = pneg %p156
        $region91: #{tpu_custom_call.1} parent=72 // pred_check_branch
          %1745 = sbr.rel (%p1743) target = $region93
        $region92: #{tpu_custom_call.1} parent=72 // pred_region
          %s1747 = ssub.s32 32, 32
          %1748 = vsyncadd [#allocation7], %s1747
          %s1750 = sshll.u32 [#allocation6], 4
          %s1751 = int_to_ptr.vmem [resolvable:$true] %s1750
          %1753 = dma.vmem_to_hbm [thread:$0]  %s1751, 32, %s5, [#allocation7]
        $region93: #{tpu_custom_call.1} parent=72 // pred_fallthru
          _
        // Predicated region
        $region94: #{tpu_custom_call.1} parent=72 // pred_check
          %p1754 = pneg %p182
        $region95: #{tpu_custom_call.1} parent=72 // pred_check_branch
          %1756 = sbr.rel (%p1754) target = $region97
        $region96: #{tpu_custom_call.1} parent=72 // pred_region
          %s1758 = ssub.s32 1024, 1024
          %1759 = vsyncadd %s1723, %s1758
          %s1760 = smul.addr %s23, 8
          %s1761 = smul.addr %s1760, 128
          %s1762 = scalar_lea.hbm %s6, %s1761
          %s1763 = sshll.u32 %s1726, 4
          %s1764 = int_to_ptr.vmem [resolvable:$true] %s1763
          %1769 = dma.vmem_to_hbm [thread:$0]  %s1764, 1024, %s1762, %s1723, 128, 128, 8
        $region97: #{tpu_custom_call.1} parent=72 // pred_fallthru
          _
        // Predicated region
        $region98: #{tpu_custom_call.1} parent=72 // pred_check
          %p1770 = pneg %p203
        $region99: #{tpu_custom_call.1} parent=72 // pred_check_branch
          %1772 = sbr.rel (%p1770) target = $region101
        $region100: #{tpu_custom_call.1} parent=72 // pred_region
          %s1774 = ssub.s32 32, 32
          %1775 = vsyncadd [#allocation7], %s1774
          %s1777 = sshll.u32 [#allocation9], 4
          %s1778 = int_to_ptr.vmem [resolvable:$true] %s1777
          %1780 = dma.vmem_to_hbm [thread:$0]  %s1778, 32, %s7, [#allocation7]
        $region101: #{tpu_custom_call.1} parent=72 // pred_fallthru
          _
        // Predicated region
        $region102: #{tpu_custom_call.1} parent=72 // pred_check
          %p1781 = pneg %p156
        $region103: #{tpu_custom_call.1} parent=72 // pred_check_branch
          %1783 = sbr.rel (%p1781) target = $region105
        $region104: #{tpu_custom_call.1} parent=72 // pred_region
          %1784 = dma.done [#allocation7], 32
        $region105: #{tpu_custom_call.1} parent=72 // pred_fallthru
          _
        // Predicated region
        $region106: #{tpu_custom_call.1} parent=72 // pred_check
          %p1785 = pneg %p203
        $region107: #{tpu_custom_call.1} parent=72 // pred_check_branch
          %1787 = sbr.rel (%p1785) target = $region109
        $region108: #{tpu_custom_call.1} parent=72 // pred_region
          %1788 = dma.done [#allocation7], 32
        $region109: #{tpu_custom_call.1} parent=72 // pred_fallthru
          _
      $region73: #{tpu_custom_call.1} parent=5 // pred_fallthru
        _
      %p1789 = scmp.le.s32.totalorder 2, %s18
      // Predicated region
      $region110: #{tpu_custom_call.1} parent=5 // pred_check
        %p1790 = pneg %p1789
      $region111: #{tpu_custom_call.1} parent=5 // pred_check_branch
        %1792 = sbr.rel (%p1790) target = $region113
      $region112: #{tpu_custom_call.1} parent=5 // pred_region
        %s1793 = ssub.s32 %s18, 2
        // Predicated region
        $region114: #{tpu_custom_call.1} parent=112 // pred_check
          %p1794 = pneg %p141
        $region115: #{tpu_custom_call.1} parent=112 // pred_check_branch
          %1796 = sbr.rel (%p1794) target = $region117
        $region116: #{tpu_custom_call.1} parent=112 // pred_region
          %s1797 = sand.u32 %s24, 1
          %s1798 = scalar_lea.sflag [#allocation5], %s1797
          %s1799 = sand.u32 %s126, 1
          %s1800 = smul.addr %s1799, 32
          %s1801 = scalar_lea.vmem [#allocation4], %s1800
          %1802 = dma.done %s1798, 512
        $region117: #{tpu_custom_call.1} parent=112 // pred_fallthru
          _
        // Predicated region
        $region118: #{tpu_custom_call.1} parent=112 // pred_check
          %p1803 = pneg %p188
        $region119: #{tpu_custom_call.1} parent=112 // pred_check_branch
          %1805 = sbr.rel (%p1803) target = $region121
        $region120: #{tpu_custom_call.1} parent=112 // pred_region
          %s1806 = sand.u32 %s24, 1
          %s1807 = scalar_lea.sflag [#allocation5], %s1806
          %s1808 = sand.u32 %s173, 1
          %s1809 = smul.addr %s1808, 64
          %s1810 = scalar_lea.vmem [#allocation8], %s1809
          %1811 = dma.done %s1807, 1024
        $region121: #{tpu_custom_call.1} parent=112 // pred_fallthru
          _
      $region113: #{tpu_custom_call.1} parent=5 // pred_fallthru
        _
    $region6: #{tpu_custom_call.1} parent=1 // loop_footer
      %s22 = sadd.s32 1, %s18
    $region7: #{tpu_custom_call.1} parent=1 // loop_footer_branch
      %17 = sbr.rel target = $region3
    $region8: #{tpu_custom_call.1} parent=1 // loop_exit
      _
    %1812 = vsyncpa [#allocation5], 1
    %s1813 = scalar_lea.sflag [#allocation5], 1
    %1814 = vsyncpa %s1813, 1
    %1815 = vsyncpa [#allocation7], 1

</llo_original>
